<compile_context>
chip_gen: v7x
topology: tpu7x:2x2x1
jax: 0.10.0
libtpu: 0.0.40
codegen_flags: <defaults>
</compile_context>

<pallas_src>
import functools
import math

import jax
import jax.numpy as jnp
from jax.experimental import pallas as pl
from jax.experimental.pallas import tpu as pltpu


def _encoder_kernel(L, E, num_heads, nlayers,
                    x_ref,
                    ln1w_ref, ln1b_ref,
                    wqkv_ref, bqkv_ref,
                    wo3_ref, bo_ref,
                    ln2w_ref, ln2b_ref,
                    w1_ref, b1_ref, w2_ref, b2_ref,
                    o_ref):
    """All encoder layers for one batch element (one grid step)."""
    hd = E // num_heads
    G = 3 * num_heads                      # q-heads, k-heads, v-heads stacked
    Hff = w1_ref.shape[-1]
    eps = 1e-5

    # ---- weights: loaded once per grid step, reused by every layer ----------
    wqkv = wqkv_ref[...]                   # (3H, E, hd) bf16 (q-scale folded in)
    wo3 = wo3_ref[...]                     # (H, hd, E)  bf16
    w1 = w1_ref[...]                       # (E, Hff)    bf16
    w2 = w2_ref[...]                       # (Hff, E)    bf16

    # ---- bias / LN broadcasts hoisted out of the layer loop -----------------
    ln1w = jnp.broadcast_to(ln1w_ref[...], (L, E))
    ln1b = jnp.broadcast_to(ln1b_ref[...], (L, E))
    ln2w = jnp.broadcast_to(ln2w_ref[...], (L, E))
    ln2b = jnp.broadcast_to(ln2b_ref[...], (L, E))
    bqkv = jnp.broadcast_to(bqkv_ref[...], (G, L, hd))
    bo = jnp.broadcast_to(bo_ref[...], (L, E))
    b1 = jnp.broadcast_to(b1_ref[...], (L, Hff))
    b2 = jnp.broadcast_to(b2_ref[...], (L, E))

    def layer(_, x):                       # x: (L, E) f32 carry
        # --- LayerNorm 1 (pre-norm), f32 statistics ---
        mu = jnp.mean(x, axis=-1, keepdims=True)
        xc = x - mu
        var = jnp.mean(xc * xc, axis=-1, keepdims=True)
        h = xc * jax.lax.rsqrt(var + eps) * ln1w + ln1b

        # --- head-major fused QKV projection: one leading-batch dot ---
        hb = jnp.broadcast_to(h.astype(jnp.bfloat16), (G, L, E))
        qkv = jnp.einsum('gle,ged->gld', hb, wqkv,
                         preferred_element_type=jnp.float32) + bqkv   # (3H, L, hd)
        q = qkv[:num_heads].astype(jnp.bfloat16)                      # (H, L, hd)
        k = qkv[num_heads:2 * num_heads].astype(jnp.bfloat16)
        v = qkv[2 * num_heads:].astype(jnp.bfloat16)

        # --- attention core, leading-batch over heads ---
        s = jnp.einsum('hld,hmd->hlm', q, k,
                       preferred_element_type=jnp.float32)            # (H, L, L)
        s = s - jnp.max(s, axis=-1, keepdims=True)
        p = jnp.exp(s)
        p = p * pl.reciprocal(jnp.sum(p, axis=-1, keepdims=True), approx=True)
        ctx = jnp.einsum('hlm,hmd->hld', p.astype(jnp.bfloat16), v,
                         preferred_element_type=jnp.float32)          # (H, L, hd)

        # --- out-projection with head reassembly fused (sum over heads) ---
        attn = jnp.einsum('hld,hde->hle', ctx.astype(jnp.bfloat16), wo3,
                          preferred_element_type=jnp.float32)         # (H, L, E)
        attn = jnp.sum(attn, axis=0) + bo                             # (L, E)
        h1 = attn + x                       # dropout1 = identity

        # --- LayerNorm 2 + feed-forward ---
        mu2 = jnp.mean(h1, axis=-1, keepdims=True)
        hc = h1 - mu2
        var2 = jnp.mean(hc * hc, axis=-1, keepdims=True)
        h2 = hc * jax.lax.rsqrt(var2 + eps) * ln2w + ln2b

        ff = jnp.dot(h2.astype(jnp.bfloat16), w1,
                     preferred_element_type=jnp.float32) + b1
        ff = jnp.maximum(ff, 0.0)           # ReLU
        ff = jnp.dot(ff.astype(jnp.bfloat16), w2,
                     preferred_element_type=jnp.float32) + b2
        return ff + h1                      # dropout2 = identity

    # Identical weights each layer (nn.TransformerEncoder deep-copies the layer).
    o_ref[0] = jax.lax.fori_loop(0, nlayers, layer, x_ref[0])


def init_params(key, nfeature, nhid):
    """Deterministic synthetic init matching the PyTorch shapes/init intent."""
    E, H = nfeature, nhid
    ks = jax.random.split(key, 6)

    def xavier(k, shape):                   # (fan_out, fan_in), torch layout
        a = math.sqrt(6.0 / (shape[0] + shape[1]))
        return jax.random.uniform(k, shape, jnp.float32, -a, a)

    return dict(
        ln1_w=jnp.ones((E,), jnp.float32), ln1_b=jnp.zeros((E,), jnp.float32),
        ln2_w=jnp.ones((E,), jnp.float32), ln2_b=jnp.zeros((E,), jnp.float32),
        in_proj_w=xavier(ks[0], (3 * E, E)), in_proj_b=jnp.zeros((3 * E,), jnp.float32),
        out_proj_w=xavier(ks[1], (E, E)),    out_proj_b=jnp.zeros((E,), jnp.float32),
        lin1_w=xavier(ks[2], (H, E)),
        lin1_b=jax.random.uniform(ks[3], (H,), jnp.float32, -0.1, 0.1),
        lin2_w=xavier(ks[4], (E, H)),
        lin2_b=jax.random.uniform(ks[5], (E,), jnp.float32, -0.1, 0.1),
    )


def my_trans_encoder(x_lne, params, num_heads, nlayers):
    """x_lne: (L, N, E) as in the PyTorch module. Returns (L, N, E)."""
    L, N, E = x_lne.shape
    H = num_heads
    Hff = params["lin1_w"].shape[0]
    hd = E // H
    scale = 1.0 / math.sqrt(hd)

    # (L, N, E) -> batch-major (N, L, E); each grid step owns one batch element.
    x = jnp.transpose(x_lne, (1, 0, 2)).astype(jnp.float32)

    # Head-major QKV weights: (3H, E, hd); q-scale folded into q weights/bias.
    def to_heads(w_t):                      # (E_in, E_out) -> (H, E_in, hd)
        return w_t.reshape(E, H, hd).transpose(1, 0, 2)

    wq_t = params["in_proj_w"][:E].T * scale
    wk_t = params["in_proj_w"][E:2 * E].T
    wv_t = params["in_proj_w"][2 * E:].T
    wqkv = jnp.concatenate([to_heads(wq_t), to_heads(wk_t), to_heads(wv_t)],
                           axis=0).astype(jnp.bfloat16)               # (3H, E, hd)

    def bias_heads(b):                      # (E,) -> (H, 1, hd)
        return b.reshape(H, 1, hd)

    bqkv = jnp.concatenate([bias_heads(params["in_proj_b"][:E] * scale),
                            bias_heads(params["in_proj_b"][E:2 * E]),
                            bias_heads(params["in_proj_b"][2 * E:])],
                           axis=0).astype(jnp.float32)                # (3H, 1, hd)

    wo3 = params["out_proj_w"].T.reshape(H, hd, E).astype(jnp.bfloat16)  # (H, hd, E)
    bo = params["out_proj_b"].reshape(1, E).astype(jnp.float32)
    ln1w = params["ln1_w"].reshape(1, E)
    ln1b = params["ln1_b"].reshape(1, E)
    ln2w = params["ln2_w"].reshape(1, E)
    ln2b = params["ln2_b"].reshape(1, E)
    w1 = params["lin1_w"].T.astype(jnp.bfloat16)                      # (E, Hff)
    b1 = params["lin1_b"].reshape(1, Hff).astype(jnp.float32)
    w2 = params["lin2_w"].T.astype(jnp.bfloat16)                      # (Hff, E)
    b2 = params["lin2_b"].reshape(1, E).astype(jnp.float32)

    kernel = functools.partial(_encoder_kernel, L, E, num_heads, nlayers)

    def full(a):                            # whole-array, grid-invariant block
        return pl.BlockSpec(a.shape, lambda n, _nd=a.ndim: (0,) * _nd)

    grid_spec = pltpu.PrefetchScalarGridSpec(
        num_scalar_prefetch=0,
        grid=(N,),
        in_specs=[pl.BlockSpec((1, L, E), lambda n: (n, 0, 0)),
                  full(ln1w), full(ln1b),
                  full(wqkv), full(bqkv),
                  full(wo3), full(bo),
                  full(ln2w), full(ln2b),
                  full(w1), full(b1), full(w2), full(b2)],
        out_specs=pl.BlockSpec((1, L, E), lambda n: (n, 0, 0)),
    )

    out = pl.pallas_call(
        kernel,
        out_shape=jax.ShapeDtypeStruct((N, L, E), jnp.float32),
        grid_spec=grid_spec,
        compiler_params=pltpu.CompilerParams(
            dimension_semantics=("parallel",)),        # v7x: 2 TCs split the batch
    )(x, ln1w, ln1b, wqkv, bqkv, wo3, bo, ln2w, ln2b, w1, b1, w2, b2)

    return jnp.transpose(out, (1, 0, 2))               # back to (L, N, E)


if __name__ == "__main__":
    # Small shapes consistent with the module: x is (length, batch, feature).
    L, N, E = 8, 2, 32            # seq=8, batch=2, nfeature=32
    nhead, nhid, nlayers = 4, 64, 2

    key = jax.random.PRNGKey(0)
    kx, kp = jax.random.split(key)
    x = jax.random.normal(kx, (L, N, E), jnp.float32)
    params = init_params(kp, E, nhid)

    out = my_trans_encoder(x, params, num_heads=nhead, nlayers=nlayers)
    out = jax.block_until_ready(out)
    assert out.shape == (L, N, E)
    assert bool(jnp.all(jnp.isfinite(out)))
    print("KERNEL_OK")
</pallas_src>

<mosaic_0001>
module attributes {stable_mosaic.version = 11 : i64} {
  func.func @_encoder_kernel(%arg0: i32, %arg1: memref<1x8x32xf32, #tpu.memory_space<vmem>>, %arg2: memref<1x32xf32, #tpu.memory_space<vmem>>, %arg3: memref<1x32xf32, #tpu.memory_space<vmem>>, %arg4: memref<12x32x8xbf16, #tpu.memory_space<vmem>>, %arg5: memref<12x1x8xf32, #tpu.memory_space<vmem>>, %arg6: memref<4x8x32xbf16, #tpu.memory_space<vmem>>, %arg7: memref<1x32xf32, #tpu.memory_space<vmem>>, %arg8: memref<1x32xf32, #tpu.memory_space<vmem>>, %arg9: memref<1x32xf32, #tpu.memory_space<vmem>>, %arg10: memref<32x64xbf16, #tpu.memory_space<vmem>>, %arg11: memref<1x64xf32, #tpu.memory_space<vmem>>, %arg12: memref<64x32xbf16, #tpu.memory_space<vmem>>, %arg13: memref<1x32xf32, #tpu.memory_space<vmem>>, %arg14: memref<1x8x32xf32, #tpu.memory_space<vmem>>) attributes {dimension_semantics = [#tpu.dimension_semantics<parallel>], iteration_bounds = array<i64: 2>, scalar_prefetch = 0 : i64, scratch_operands = 0 : i64, tpu.core_type = #tpu.core_type<tc>, window_params = [{transform_indices = @transform_0, window_bounds = array<i64: 1, 8, 32>}, {pipeline_mode = #tpu.pipeline_mode<synchronous>, transform_indices = @transform_1, window_bounds = array<i64: 1, 32>}, {pipeline_mode = #tpu.pipeline_mode<synchronous>, transform_indices = @transform_2, window_bounds = array<i64: 1, 32>}, {pipeline_mode = #tpu.pipeline_mode<synchronous>, transform_indices = @transform_3, window_bounds = array<i64: 12, 32, 8>}, {pipeline_mode = #tpu.pipeline_mode<synchronous>, transform_indices = @transform_4, window_bounds = array<i64: 12, 1, 8>}, {pipeline_mode = #tpu.pipeline_mode<synchronous>, transform_indices = @transform_5, window_bounds = array<i64: 4, 8, 32>}, {pipeline_mode = #tpu.pipeline_mode<synchronous>, transform_indices = @transform_6, window_bounds = array<i64: 1, 32>}, {pipeline_mode = #tpu.pipeline_mode<synchronous>, transform_indices = @transform_7, window_bounds = array<i64: 1, 32>}, {pipeline_mode = #tpu.pipeline_mode<synchronous>, transform_indices = @transform_8, window_bounds = array<i64: 1, 32>}, {pipeline_mode = #tpu.pipeline_mode<synchronous>, transform_indices = @transform_9, window_bounds = array<i64: 32, 64>}, {pipeline_mode = #tpu.pipeline_mode<synchronous>, transform_indices = @transform_10, window_bounds = array<i64: 1, 64>}, {pipeline_mode = #tpu.pipeline_mode<synchronous>, transform_indices = @transform_11, window_bounds = array<i64: 64, 32>}, {pipeline_mode = #tpu.pipeline_mode<synchronous>, transform_indices = @transform_12, window_bounds = array<i64: 1, 32>}, {transform_indices = @transform_13, window_bounds = array<i64: 1, 8, 32>}]} {
    %c0 = arith.constant 0 : index
    %c0_0 = arith.constant 0 : index
    %c0_1 = arith.constant 0 : index
    %0 = vector.load %arg4[%c0, %c0_0, %c0_1] : memref<12x32x8xbf16, #tpu.memory_space<vmem>>, vector<12x32x8xbf16>
    %c0_2 = arith.constant 0 : index
    %c0_3 = arith.constant 0 : index
    %c0_4 = arith.constant 0 : index
    %1 = vector.load %arg6[%c0_2, %c0_3, %c0_4] : memref<4x8x32xbf16, #tpu.memory_space<vmem>>, vector<4x8x32xbf16>
    %c0_5 = arith.constant 0 : index
    %c0_6 = arith.constant 0 : index
    %2 = vector.load %arg10[%c0_5, %c0_6] : memref<32x64xbf16, #tpu.memory_space<vmem>>, vector<32x64xbf16>
    %c0_7 = arith.constant 0 : index
    %c0_8 = arith.constant 0 : index
    %3 = vector.load %arg12[%c0_7, %c0_8] : memref<64x32xbf16, #tpu.memory_space<vmem>>, vector<64x32xbf16>
    %c0_9 = arith.constant 0 : index
    %c0_10 = arith.constant 0 : index
    %4 = vector.load %arg2[%c0_9, %c0_10] : memref<1x32xf32, #tpu.memory_space<vmem>>, vector<1x32xf32>
    %5 = vector.shape_cast %4 : vector<1x32xf32> to vector<1x32xf32>
    %6 = vector.broadcast %5 : vector<1x32xf32> to vector<8x32xf32>
    %c0_11 = arith.constant 0 : index
    %c0_12 = arith.constant 0 : index
    %7 = vector.load %arg3[%c0_11, %c0_12] : memref<1x32xf32, #tpu.memory_space<vmem>>, vector<1x32xf32>
    %8 = vector.shape_cast %7 : vector<1x32xf32> to vector<1x32xf32>
    %9 = vector.broadcast %8 : vector<1x32xf32> to vector<8x32xf32>
    %c0_13 = arith.constant 0 : index
    %c0_14 = arith.constant 0 : index
    %10 = vector.load %arg8[%c0_13, %c0_14] : memref<1x32xf32, #tpu.memory_space<vmem>>, vector<1x32xf32>
    %11 = vector.shape_cast %10 : vector<1x32xf32> to vector<1x32xf32>
    %12 = vector.broadcast %11 : vector<1x32xf32> to vector<8x32xf32>
    %c0_15 = arith.constant 0 : index
    %c0_16 = arith.constant 0 : index
    %13 = vector.load %arg9[%c0_15, %c0_16] : memref<1x32xf32, #tpu.memory_space<vmem>>, vector<1x32xf32>
    %14 = vector.shape_cast %13 : vector<1x32xf32> to vector<1x32xf32>
    %15 = vector.broadcast %14 : vector<1x32xf32> to vector<8x32xf32>
    %c0_17 = arith.constant 0 : index
    %c0_18 = arith.constant 0 : index
    %c0_19 = arith.constant 0 : index
    %16 = vector.load %arg5[%c0_17, %c0_18, %c0_19] : memref<12x1x8xf32, #tpu.memory_space<vmem>>, vector<12x1x8xf32>
    %17 = vector.shape_cast %16 : vector<12x1x8xf32> to vector<12x1x8xf32>
    %18 = vector.broadcast %17 : vector<12x1x8xf32> to vector<12x8x8xf32>
    %c0_20 = arith.constant 0 : index
    %c0_21 = arith.constant 0 : index
    %19 = vector.load %arg7[%c0_20, %c0_21] : memref<1x32xf32, #tpu.memory_space<vmem>>, vector<1x32xf32>
    %20 = vector.shape_cast %19 : vector<1x32xf32> to vector<1x32xf32>
    %21 = vector.broadcast %20 : vector<1x32xf32> to vector<8x32xf32>
    %c0_22 = arith.constant 0 : index
    %c0_23 = arith.constant 0 : index
    %22 = vector.load %arg11[%c0_22, %c0_23] : memref<1x64xf32, #tpu.memory_space<vmem>>, vector<1x64xf32>
    %23 = vector.shape_cast %22 : vector<1x64xf32> to vector<1x64xf32>
    %24 = vector.broadcast %23 : vector<1x64xf32> to vector<8x64xf32>
    %c0_24 = arith.constant 0 : index
    %c0_25 = arith.constant 0 : index
    %25 = vector.load %arg13[%c0_24, %c0_25] : memref<1x32xf32, #tpu.memory_space<vmem>>, vector<1x32xf32>
    %26 = vector.shape_cast %25 : vector<1x32xf32> to vector<1x32xf32>
    %27 = vector.broadcast %26 : vector<1x32xf32> to vector<8x32xf32>
    %c0_26 = arith.constant 0 : index
    %c0_27 = arith.constant 0 : index
    %c0_28 = arith.constant 0 : index
    %28 = vector.load %arg1[%c0_26, %c0_27, %c0_28] : memref<1x8x32xf32, #tpu.memory_space<vmem>>, vector<1x8x32xf32>
    %29 = vector.shape_cast %28 : vector<1x8x32xf32> to vector<8x32xf32>
    %c0_i32 = arith.constant 0 : i32
    %c2_i32 = arith.constant 2 : i32
    %30 = arith.addi %c0_i32, %c2_i32 : i32
    %c1_i32 = arith.constant 1 : i32
    %31 = scf.for %arg15 = %c0_i32 to %30 step %c1_i32 iter_args(%arg16 = %29) -> (vector<8x32xf32>)  : i32 {
      %cst = arith.constant dense<0.000000e+00> : vector<8xf32>
      %35 = vector.multi_reduction <add>, %arg16, %cst [1] : vector<8x32xf32> to vector<8xf32>
      %36 = vector.shape_cast %35 : vector<8xf32> to vector<8x1xf32>
      %cst_32 = arith.constant 3.200000e+01 : f32
      %37 = vector.broadcast %cst_32 : f32 to vector<8x1xf32>
      %38 = arith.divf %36, %37 : vector<8x1xf32>
      %39 = vector.broadcast %38 : vector<8x1xf32> to vector<8x32xf32>
      %40 = arith.subf %arg16, %39 : vector<8x32xf32>
      %41 = arith.mulf %40, %40 : vector<8x32xf32>
      %cst_33 = arith.constant dense<0.000000e+00> : vector<8xf32>
      %42 = vector.multi_reduction <add>, %41, %cst_33 [1] : vector<8x32xf32> to vector<8xf32>
      %43 = vector.shape_cast %42 : vector<8xf32> to vector<8x1xf32>
      %cst_34 = arith.constant 3.200000e+01 : f32
      %44 = vector.broadcast %cst_34 : f32 to vector<8x1xf32>
      %45 = arith.divf %43, %44 : vector<8x1xf32>
      %cst_35 = arith.constant 9.99999974E-6 : f32
      %46 = vector.broadcast %cst_35 : f32 to vector<8x1xf32>
      %47 = arith.addf %45, %46 : vector<8x1xf32>
      %48 = math.rsqrt %47 : vector<8x1xf32>
      %49 = vector.broadcast %48 : vector<8x1xf32> to vector<8x32xf32>
      %50 = arith.mulf %40, %49 : vector<8x32xf32>
      %51 = arith.mulf %50, %6 : vector<8x32xf32>
      %52 = arith.addf %51, %9 : vector<8x32xf32>
      %53 = arith.truncf %52 : vector<8x32xf32> to vector<8x32xbf16>
      %54 = vector.shape_cast %53 : vector<8x32xbf16> to vector<1x8x32xbf16>
      %55 = vector.broadcast %54 : vector<1x8x32xbf16> to vector<12x8x32xbf16>
      "tpu.trace_start"() <{level = 10 : i32, message = "gle,ged->gld"}> : () -> ()
      %cst_36 = arith.constant dense<0.000000e+00> : vector<12x8x8xf32>
      %56 = tpu.matmul %55, %0, %cst_36 {dimension_numbers = #tpu.dot_dimension_numbers<[2], [1], [1], [2], [0, 0, 0, 1, 1, 2], [0], [0]>} : vector<12x8x32xbf16>, vector<12x32x8xbf16>, vector<12x8x8xf32> -> vector<12x8x8xf32>
      "tpu.trace_stop"() : () -> ()
      %57 = arith.addf %56, %18 : vector<12x8x8xf32>
      %58 = vector.extract_strided_slice %57 {offsets = [0, 0, 0], sizes = [4, 8, 8], strides = [1, 1, 1]} : vector<12x8x8xf32> to vector<4x8x8xf32>
      %59 = arith.truncf %58 : vector<4x8x8xf32> to vector<4x8x8xbf16>
      %60 = vector.extract_strided_slice %57 {offsets = [4, 0, 0], sizes = [4, 8, 8], strides = [1, 1, 1]} : vector<12x8x8xf32> to vector<4x8x8xf32>
      %61 = arith.truncf %60 : vector<4x8x8xf32> to vector<4x8x8xbf16>
      %62 = vector.extract_strided_slice %57 {offsets = [8, 0, 0], sizes = [4, 8, 8], strides = [1, 1, 1]} : vector<12x8x8xf32> to vector<4x8x8xf32>
      %63 = arith.truncf %62 : vector<4x8x8xf32> to vector<4x8x8xbf16>
      "tpu.trace_start"() <{level = 10 : i32, message = "hld,hmd->hlm"}> : () -> ()
      %cst_37 = arith.constant dense<0.000000e+00> : vector<4x8x8xf32>
      %64 = tpu.matmul %59, %61, %cst_37 {dimension_numbers = #tpu.dot_dimension_numbers<[2], [2], [1], [1], [0, 0, 0, 1, 1, 1], [0], [0]>} : vector<4x8x8xbf16>, vector<4x8x8xbf16>, vector<4x8x8xf32> -> vector<4x8x8xf32>
      "tpu.trace_stop"() : () -> ()
      %cst_38 = arith.constant dense<0xFF800000> : vector<4x8xf32>
      %65 = vector.multi_reduction <maximumf>, %64, %cst_38 [2] : vector<4x8x8xf32> to vector<4x8xf32>
      %66 = vector.shape_cast %65 : vector<4x8xf32> to vector<4x8x1xf32>
      %67 = vector.broadcast %66 : vector<4x8x1xf32> to vector<4x8x8xf32>
      %68 = arith.subf %64, %67 : vector<4x8x8xf32>
      %69 = math.exp %68 : vector<4x8x8xf32>
      %cst_39 = arith.constant dense<0.000000e+00> : vector<4x8xf32>
      %70 = vector.multi_reduction <add>, %69, %cst_39 [2] : vector<4x8x8xf32> to vector<4x8xf32>
      %71 = vector.shape_cast %70 : vector<4x8xf32> to vector<4x8x1xf32>
      %72 = tpu.reciprocal %71 {approx = true} : vector<4x8x1xf32> -> vector<4x8x1xf32>
      %73 = vector.broadcast %72 : vector<4x8x1xf32> to vector<4x8x8xf32>
      %74 = arith.mulf %69, %73 : vector<4x8x8xf32>
      %75 = arith.truncf %74 : vector<4x8x8xf32> to vector<4x8x8xbf16>
      "tpu.trace_start"() <{level = 10 : i32, message = "hlm,hmd->hld"}> : () -> ()
      %cst_40 = arith.constant dense<0.000000e+00> : vector<4x8x8xf32>
      %76 = tpu.matmul %75, %63, %cst_40 {dimension_numbers = #tpu.dot_dimension_numbers<[2], [1], [1], [2], [0, 0, 0, 1, 1, 2], [0], [0]>} : vector<4x8x8xbf16>, vector<4x8x8xbf16>, vector<4x8x8xf32> -> vector<4x8x8xf32>
      "tpu.trace_stop"() : () -> ()
      %77 = arith.truncf %76 : vector<4x8x8xf32> to vector<4x8x8xbf16>
      "tpu.trace_start"() <{level = 10 : i32, message = "hld,hde->hle"}> : () -> ()
      %cst_41 = arith.constant dense<0.000000e+00> : vector<4x8x32xf32>
      %78 = tpu.matmul %77, %1, %cst_41 {dimension_numbers = #tpu.dot_dimension_numbers<[2], [1], [1], [2], [0, 0, 0, 1, 1, 2], [0], [0]>} : vector<4x8x8xbf16>, vector<4x8x32xbf16>, vector<4x8x32xf32> -> vector<4x8x32xf32>
      "tpu.trace_stop"() : () -> ()
      %cst_42 = arith.constant dense<0.000000e+00> : vector<8x32xf32>
      %79 = vector.multi_reduction <add>, %78, %cst_42 [0] : vector<4x8x32xf32> to vector<8x32xf32>
      %80 = arith.addf %79, %21 : vector<8x32xf32>
      %81 = arith.addf %80, %arg16 : vector<8x32xf32>
      %cst_43 = arith.constant dense<0.000000e+00> : vector<8xf32>
      %82 = vector.multi_reduction <add>, %81, %cst_43 [1] : vector<8x32xf32> to vector<8xf32>
      %83 = vector.shape_cast %82 : vector<8xf32> to vector<8x1xf32>
      %cst_44 = arith.constant 3.200000e+01 : f32
      %84 = vector.broadcast %cst_44 : f32 to vector<8x1xf32>
      %85 = arith.divf %83, %84 : vector<8x1xf32>
      %86 = vector.broadcast %85 : vector<8x1xf32> to vector<8x32xf32>
      %87 = arith.subf %81, %86 : vector<8x32xf32>
      %88 = arith.mulf %87, %87 : vector<8x32xf32>
      %cst_45 = arith.constant dense<0.000000e+00> : vector<8xf32>
      %89 = vector.multi_reduction <add>, %88, %cst_45 [1] : vector<8x32xf32> to vector<8xf32>
      %90 = vector.shape_cast %89 : vector<8xf32> to vector<8x1xf32>
      %cst_46 = arith.constant 3.200000e+01 : f32
      %91 = vector.broadcast %cst_46 : f32 to vector<8x1xf32>
      %92 = arith.divf %90, %91 : vector<8x1xf32>
      %cst_47 = arith.constant 9.99999974E-6 : f32
      %93 = vector.broadcast %cst_47 : f32 to vector<8x1xf32>
      %94 = arith.addf %92, %93 : vector<8x1xf32>
      %95 = math.rsqrt %94 : vector<8x1xf32>
      %96 = vector.broadcast %95 : vector<8x1xf32> to vector<8x32xf32>
      %97 = arith.mulf %87, %96 : vector<8x32xf32>
      %98 = arith.mulf %97, %12 : vector<8x32xf32>
      %99 = arith.addf %98, %15 : vector<8x32xf32>
      %100 = arith.truncf %99 : vector<8x32xf32> to vector<8x32xbf16>
      %cst_48 = arith.constant dense<0.000000e+00> : vector<8x64xf32>
      %101 = tpu.matmul %100, %2, %cst_48 {dimension_numbers = #tpu.dot_dimension_numbers<[1], [0], [0], [1], [0, 0, 1, 1], [], []>} : vector<8x32xbf16>, vector<32x64xbf16>, vector<8x64xf32> -> vector<8x64xf32>
      %102 = arith.addf %101, %24 : vector<8x64xf32>
      %cst_49 = arith.constant 0.000000e+00 : f32
      %103 = vector.broadcast %cst_49 : f32 to vector<8x64xf32>
      %104 = arith.maximumf %102, %103 : vector<8x64xf32>
      %105 = arith.truncf %104 : vector<8x64xf32> to vector<8x64xbf16>
      %cst_50 = arith.constant dense<0.000000e+00> : vector<8x32xf32>
      %106 = tpu.matmul %105, %3, %cst_50 {dimension_numbers = #tpu.dot_dimension_numbers<[1], [0], [0], [1], [0, 0, 1, 1], [], []>} : vector<8x64xbf16>, vector<64x32xbf16>, vector<8x32xf32> -> vector<8x32xf32>
      %107 = arith.addf %106, %27 : vector<8x32xf32>
      %108 = arith.addf %107, %81 : vector<8x32xf32>
      scf.yield %108 : vector<8x32xf32>
    }
    %c0_29 = arith.constant 0 : index
    %c0_30 = arith.constant 0 : index
    %c0_31 = arith.constant 0 : index
    %32 = vector.load %arg14[%c0_29, %c0_30, %c0_31] : memref<1x8x32xf32, #tpu.memory_space<vmem>>, vector<1x8x32xf32>
    %33 = vector.shape_cast %32 : vector<1x8x32xf32> to vector<8x32xf32>
    %34 = vector.shape_cast %31 : vector<8x32xf32> to vector<1x8x32xf32>
    tpu.vector_store %arg14[%c0_29, %c0_30, %c0_31], %34 {strides = array<i32>} : memref<1x8x32xf32, #tpu.memory_space<vmem>>, vector<1x8x32xf32>,
    return
  }
  func.func @transform_0(%arg0: i32) -> (i32, i32, i32) {
    %c0_i32 = arith.constant 0 : i32
    %c0_i32_0 = arith.constant 0 : i32
    %c0_i32_1 = arith.constant 0 : i32
    return %arg0, %c0_i32, %c0_i32_0 : i32, i32, i32
  }
  func.func @transform_1(%arg0: i32) -> (i32, i32) {
    %c0_i32 = arith.constant 0 : i32
    %c0_i32_0 = arith.constant 0 : i32
    %c0_i32_1 = arith.constant 0 : i32
    return %c0_i32, %c0_i32_0 : i32, i32
  }
  func.func @transform_2(%arg0: i32) -> (i32, i32) {
    %c0_i32 = arith.constant 0 : i32
    %c0_i32_0 = arith.constant 0 : i32
    %c0_i32_1 = arith.constant 0 : i32
    return %c0_i32, %c0_i32_0 : i32, i32
  }
  func.func @transform_3(%arg0: i32) -> (i32, i32, i32) {
    %c0_i32 = arith.constant 0 : i32
    %c0_i32_0 = arith.constant 0 : i32
    %c0_i32_1 = arith.constant 0 : i32
    %c0_i32_2 = arith.constant 0 : i32
    return %c0_i32, %c0_i32_0, %c0_i32_1 : i32, i32, i32
  }
  func.func @transform_4(%arg0: i32) -> (i32, i32, i32) {
    %c0_i32 = arith.constant 0 : i32
    %c0_i32_0 = arith.constant 0 : i32
    %c0_i32_1 = arith.constant 0 : i32
    %c0_i32_2 = arith.constant 0 : i32
    return %c0_i32, %c0_i32_0, %c0_i32_1 : i32, i32, i32
  }
  func.func @transform_5(%arg0: i32) -> (i32, i32, i32) {
    %c0_i32 = arith.constant 0 : i32
    %c0_i32_0 = arith.constant 0 : i32
    %c0_i32_1 = arith.constant 0 : i32
    %c0_i32_2 = arith.constant 0 : i32
    return %c0_i32, %c0_i32_0, %c0_i32_1 : i32, i32, i32
  }
  func.func @transform_6(%arg0: i32) -> (i32, i32) {
    %c0_i32 = arith.constant 0 : i32
    %c0_i32_0 = arith.constant 0 : i32
    %c0_i32_1 = arith.constant 0 : i32
    return %c0_i32, %c0_i32_0 : i32, i32
  }
  func.func @transform_7(%arg0: i32) -> (i32, i32) {
    %c0_i32 = arith.constant 0 : i32
    %c0_i32_0 = arith.constant 0 : i32
    %c0_i32_1 = arith.constant 0 : i32
    return %c0_i32, %c0_i32_0 : i32, i32
  }
  func.func @transform_8(%arg0: i32) -> (i32, i32) {
    %c0_i32 = arith.constant 0 : i32
    %c0_i32_0 = arith.constant 0 : i32
    %c0_i32_1 = arith.constant 0 : i32
    return %c0_i32, %c0_i32_0 : i32, i32
  }
  func.func @transform_9(%arg0: i32) -> (i32, i32) {
    %c0_i32 = arith.constant 0 : i32
    %c0_i32_0 = arith.constant 0 : i32
    %c0_i32_1 = arith.constant 0 : i32
    return %c0_i32, %c0_i32_0 : i32, i32
  }
  func.func @transform_10(%arg0: i32) -> (i32, i32) {
    %c0_i32 = arith.constant 0 : i32
    %c0_i32_0 = arith.constant 0 : i32
    %c0_i32_1 = arith.constant 0 : i32
    return %c0_i32, %c0_i32_0 : i32, i32
  }
  func.func @transform_11(%arg0: i32) -> (i32, i32) {
    %c0_i32 = arith.constant 0 : i32
    %c0_i32_0 = arith.constant 0 : i32
    %c0_i32_1 = arith.constant 0 : i32
    return %c0_i32, %c0_i32_0 : i32, i32
  }
  func.func @transform_12(%arg0: i32) -> (i32, i32) {
    %c0_i32 = arith.constant 0 : i32
    %c0_i32_0 = arith.constant 0 : i32
    %c0_i32_1 = arith.constant 0 : i32
    return %c0_i32, %c0_i32_0 : i32, i32
  }
  func.func @transform_13(%arg0: i32) -> (i32, i32, i32) {
    %c0_i32 = arith.constant 0 : i32
    %c0_i32_0 = arith.constant 0 : i32
    %c0_i32_1 = arith.constant 0 : i32
    return %arg0, %c0_i32, %c0_i32_0 : i32, i32, i32
  }
}

</mosaic_0001>

<llo_original>
// kernel: tpu_custom_call.1
$region0: #{tpu_custom_call.1}
  #allocation0 [shape = 'u32[]', space=smem, size = 0x4, offset = 0x4, fixed_abs, tag = 'smem constant byte address 0x4 - core index']
  #allocation1 [shape = 'u32[144,128]{1,0:T(1,128)}', space=vmem, size = 0x12000, scoped, tag = 'internal scratch']
  %s0 = inlined_call_operand.vmem [shape: f32[2,8,32], index: 0, kind: input, shape index: {}]
  %s1 = inlined_call_operand.vmem [shape: f32[1,32], index: 1, kind: input, shape index: {}]
  %s2 = inlined_call_operand.vmem [shape: f32[1,32], index: 2, kind: input, shape index: {}]
  %s3 = inlined_call_operand.vmem [shape: bf16[12,32,8], index: 3, kind: input, shape index: {}]
  %s4 = inlined_call_operand.vmem [shape: f32[12,1,8], index: 4, kind: input, shape index: {}]
  %s5 = inlined_call_operand.vmem [shape: bf16[4,8,32], index: 5, kind: input, shape index: {}]
  %s6 = inlined_call_operand.vmem [shape: f32[1,32], index: 6, kind: input, shape index: {}]
  %s7 = inlined_call_operand.vmem [shape: f32[1,32], index: 7, kind: input, shape index: {}]
  %s8 = inlined_call_operand.vmem [shape: f32[1,32], index: 8, kind: input, shape index: {}]
  %s9 = inlined_call_operand.vmem [shape: bf16[32,64], index: 9, kind: input, shape index: {}]
  %s10 = inlined_call_operand.vmem [shape: f32[1,64], index: 10, kind: input, shape index: {}]
  %s11 = inlined_call_operand.vmem [shape: bf16[64,32], index: 11, kind: input, shape index: {}]
  %s12 = inlined_call_operand.vmem [shape: f32[1,32], index: 12, kind: input, shape index: {}]
  %s13 = inlined_call_operand.hbm [shape: f32[2,8,32], index: 13, kind: output, shape index: {}]
  %s14 = sld [smem:[#allocation0]]
  $region92: #{tpu_custom_call.1} parent=0
    _
  %s16 = ssub.s32 1, %s14
  %s17 = scalar_select 0, %s16, %s14
  $region1: #{tpu_custom_call.1} parent=0
    #allocation2 [shape = 'u8[8192]{0}', space=vmem, size = 0x2000, scoped, tag = 'output window, operand 0']
    #allocation3 [shape = 's32[2]{0}', space=sflag, size = 0x8, scoped, tag = 'scoped memory for tpu_custom_call.1']
    %18 = vsyncpa [#allocation3], 0
    %s19 = scalar_lea.sflag [#allocation3], 1
    %20 = vsyncpa %s19, 0
    loop: start=0, step=1, limit=4
    $region2: #{tpu_custom_call.1} parent=1 // loop_pre_header
      _
    $region3: #{tpu_custom_call.1} parent=1 // loop_header
      %s22 = sphi 0, %s26
      %p23 = scmp.ge.s32.totalorder %s22, 4
      %s32 = sphi 0, %s34
      %s35 = sphi 0, %s32
      %s36 = sphi 0, %s35
      %s52 = sphi 0, %s36
      %s56 = sphi 0, %s56
      %s58 = sphi 0, %s56
      %s59 = sphi 0, %s58
      %s73 = sphi 0, %s59
      %s77 = sphi 0, %s77
      %s79 = sphi 0, %s77
      %s80 = sphi 0, %s79
      %s94 = sphi 0, %s80
      %s98 = sphi 0, %s98
      %s100 = sphi 0, %s98
      %s101 = sphi 0, %s100
      %s115 = sphi 0, %s101
      %s119 = sphi 0, %s119
      %s121 = sphi 0, %s119
      %s122 = sphi 0, %s121
      %s136 = sphi 0, %s122
      %s140 = sphi 0, %s140
      %s142 = sphi 0, %s140
      %s143 = sphi 0, %s142
      %s157 = sphi 0, %s143
      %s161 = sphi 0, %s161
      %s163 = sphi 0, %s161
      %s164 = sphi 0, %s163
      %s178 = sphi 0, %s164
      %s182 = sphi 0, %s182
      %s184 = sphi 0, %s182
      %s185 = sphi 0, %s184
      %s199 = sphi 0, %s185
      %s203 = sphi 0, %s203
      %s205 = sphi 0, %s203
      %s206 = sphi 0, %s205
      %s220 = sphi 0, %s206
      %s224 = sphi 0, %s224
      %s226 = sphi 0, %s224
      %s227 = sphi 0, %s226
      %s241 = sphi 0, %s227
      %s245 = sphi 0, %s245
      %s247 = sphi 0, %s245
      %s248 = sphi 0, %s247
      %s262 = sphi 0, %s248
      %s266 = sphi 0, %s266
      %s268 = sphi 0, %s266
      %s269 = sphi 0, %s268
      %s283 = sphi 0, %s269
      %s287 = sphi 0, %s287
      %s289 = sphi 0, %s287
      %s290 = sphi 0, %s289
      %s304 = sphi 0, %s290
      %s310 = sphi 0, %s312
      %s313 = sphi 0, %s310
      %s314 = sphi 0, %s313
      %s330 = sphi 0, %s314
    $region4: #{tpu_custom_call.1} parent=1 // loop_header_branch
      %25 = sbr.rel (%p23) target = $region8
    $region5: #{tpu_custom_call.1} parent=1 // loop_body
      %s27 = ssub.s32 %s22, 1
      %s28 = ssub.s32 %s22, 2
      %s29 = sadd.s32 %s22, 1
      %s30 = ssub.s32 %s22, %s29
      %p31 = scmp.eq.s32.totalorder %s30, 0
      %s33 = sadd.s32 %s32, 1
      %s34 = scalar_select %p31, %s32, %s33
      %p37 = pneg %p31
      %p38 = scmp.eq.s32.totalorder %s22, 1
      %p39 = por %p37, %p38
      %p40 = scmp.ne.s32.totalorder %s32, %s35
      %p41 = scmp.eq.s32.totalorder %s22, 0
      %p42 = por %p40, %p41
      %p43 = scmp.ne.s32.totalorder %s32, %s35
      %p44 = scmp.eq.s32.totalorder %s27, 1
      %p45 = por %p43, %p44
      %p46 = scmp.ne.s32.totalorder %s35, %s36
      %p47 = scmp.eq.s32.totalorder %s27, 0
      %p48 = por %p46, %p47
      %p49 = scmp.ne.s32.totalorder %s35, %s36
      %p50 = scmp.eq.s32.totalorder %s28, 1
      %p51 = por %p49, %p50
      %p53 = scmp.ne.s32.totalorder %s36, %s52
      %p54 = scmp.eq.s32.totalorder %s28, 0
      %p55 = por %p53, %p54
      %s57 = sadd.s32 %s56, 1
      %p60 = scmp.eq.s32.totalorder %s22, 1
      %p61 = scmp.ne.s32.totalorder %s56, %s58
      %p62 = scmp.eq.s32.totalorder %s22, 0
      %p63 = por %p61, %p62
      %p64 = scmp.ne.s32.totalorder %s56, %s58
      %p65 = scmp.eq.s32.totalorder %s27, 1
      %p66 = por %p64, %p65
      %p67 = scmp.ne.s32.totalorder %s58, %s59
      %p68 = scmp.eq.s32.totalorder %s27, 0
      %p69 = por %p67, %p68
      %p70 = scmp.ne.s32.totalorder %s58, %s59
      %p71 = scmp.eq.s32.totalorder %s28, 1
      %p72 = por %p70, %p71
      %p74 = scmp.ne.s32.totalorder %s59, %s73
      %p75 = scmp.eq.s32.totalorder %s28, 0
      %p76 = por %p74, %p75
      %s78 = sadd.s32 %s77, 1
      %p81 = scmp.eq.s32.totalorder %s22, 1
      %p82 = scmp.ne.s32.totalorder %s77, %s79
      %p83 = scmp.eq.s32.totalorder %s22, 0
      %p84 = por %p82, %p83
      %p85 = scmp.ne.s32.totalorder %s77, %s79
      %p86 = scmp.eq.s32.totalorder %s27, 1
      %p87 = por %p85, %p86
      %p88 = scmp.ne.s32.totalorder %s79, %s80
      %p89 = scmp.eq.s32.totalorder %s27, 0
      %p90 = por %p88, %p89
      %p91 = scmp.ne.s32.totalorder %s79, %s80
      %p92 = scmp.eq.s32.totalorder %s28, 1
      %p93 = por %p91, %p92
      %p95 = scmp.ne.s32.totalorder %s80, %s94
      %p96 = scmp.eq.s32.totalorder %s28, 0
      %p97 = por %p95, %p96
      %s99 = sadd.s32 %s98, 1
      %p102 = scmp.eq.s32.totalorder %s22, 1
      %p103 = scmp.ne.s32.totalorder %s98, %s100
      %p104 = scmp.eq.s32.totalorder %s22, 0
      %p105 = por %p103, %p104
      %p106 = scmp.ne.s32.totalorder %s98, %s100
      %p107 = scmp.eq.s32.totalorder %s27, 1
      %p108 = por %p106, %p107
      %p109 = scmp.ne.s32.totalorder %s100, %s101
      %p110 = scmp.eq.s32.totalorder %s27, 0
      %p111 = por %p109, %p110
      %p112 = scmp.ne.s32.totalorder %s100, %s101
      %p113 = scmp.eq.s32.totalorder %s28, 1
      %p114 = por %p112, %p113
      %p116 = scmp.ne.s32.totalorder %s101, %s115
      %p117 = scmp.eq.s32.totalorder %s28, 0
      %p118 = por %p116, %p117
      %s120 = sadd.s32 %s119, 1
      %p123 = scmp.eq.s32.totalorder %s22, 1
      %p124 = scmp.ne.s32.totalorder %s119, %s121
      %p125 = scmp.eq.s32.totalorder %s22, 0
      %p126 = por %p124, %p125
      %p127 = scmp.ne.s32.totalorder %s119, %s121
      %p128 = scmp.eq.s32.totalorder %s27, 1
      %p129 = por %p127, %p128
      %p130 = scmp.ne.s32.totalorder %s121, %s122
      %p131 = scmp.eq.s32.totalorder %s27, 0
      %p132 = por %p130, %p131
      %p133 = scmp.ne.s32.totalorder %s121, %s122
      %p134 = scmp.eq.s32.totalorder %s28, 1
      %p135 = por %p133, %p134
      %p137 = scmp.ne.s32.totalorder %s122, %s136
      %p138 = scmp.eq.s32.totalorder %s28, 0
      %p139 = por %p137, %p138
      %s141 = sadd.s32 %s140, 1
      %p144 = scmp.eq.s32.totalorder %s22, 1
      %p145 = scmp.ne.s32.totalorder %s140, %s142
      %p146 = scmp.eq.s32.totalorder %s22, 0
      %p147 = por %p145, %p146
      %p148 = scmp.ne.s32.totalorder %s140, %s142
      %p149 = scmp.eq.s32.totalorder %s27, 1
      %p150 = por %p148, %p149
      %p151 = scmp.ne.s32.totalorder %s142, %s143
      %p152 = scmp.eq.s32.totalorder %s27, 0
      %p153 = por %p151, %p152
      %p154 = scmp.ne.s32.totalorder %s142, %s143
      %p155 = scmp.eq.s32.totalorder %s28, 1
      %p156 = por %p154, %p155
      %p158 = scmp.ne.s32.totalorder %s143, %s157
      %p159 = scmp.eq.s32.totalorder %s28, 0
      %p160 = por %p158, %p159
      %s162 = sadd.s32 %s161, 1
      %p165 = scmp.eq.s32.totalorder %s22, 1
      %p166 = scmp.ne.s32.totalorder %s161, %s163
      %p167 = scmp.eq.s32.totalorder %s22, 0
      %p168 = por %p166, %p167
      %p169 = scmp.ne.s32.totalorder %s161, %s163
      %p170 = scmp.eq.s32.totalorder %s27, 1
      %p171 = por %p169, %p170
      %p172 = scmp.ne.s32.totalorder %s163, %s164
      %p173 = scmp.eq.s32.totalorder %s27, 0
      %p174 = por %p172, %p173
      %p175 = scmp.ne.s32.totalorder %s163, %s164
      %p176 = scmp.eq.s32.totalorder %s28, 1
      %p177 = por %p175, %p176
      %p179 = scmp.ne.s32.totalorder %s164, %s178
      %p180 = scmp.eq.s32.totalorder %s28, 0
      %p181 = por %p179, %p180
      %s183 = sadd.s32 %s182, 1
      %p186 = scmp.eq.s32.totalorder %s22, 1
      %p187 = scmp.ne.s32.totalorder %s182, %s184
      %p188 = scmp.eq.s32.totalorder %s22, 0
      %p189 = por %p187, %p188
      %p190 = scmp.ne.s32.totalorder %s182, %s184
      %p191 = scmp.eq.s32.totalorder %s27, 1
      %p192 = por %p190, %p191
      %p193 = scmp.ne.s32.totalorder %s184, %s185
      %p194 = scmp.eq.s32.totalorder %s27, 0
      %p195 = por %p193, %p194
      %p196 = scmp.ne.s32.totalorder %s184, %s185
      %p197 = scmp.eq.s32.totalorder %s28, 1
      %p198 = por %p196, %p197
      %p200 = scmp.ne.s32.totalorder %s185, %s199
      %p201 = scmp.eq.s32.totalorder %s28, 0
      %p202 = por %p200, %p201
      %s204 = sadd.s32 %s203, 1
      %p207 = scmp.eq.s32.totalorder %s22, 1
      %p208 = scmp.ne.s32.totalorder %s203, %s205
      %p209 = scmp.eq.s32.totalorder %s22, 0
      %p210 = por %p208, %p209
      %p211 = scmp.ne.s32.totalorder %s203, %s205
      %p212 = scmp.eq.s32.totalorder %s27, 1
      %p213 = por %p211, %p212
      %p214 = scmp.ne.s32.totalorder %s205, %s206
      %p215 = scmp.eq.s32.totalorder %s27, 0
      %p216 = por %p214, %p215
      %p217 = scmp.ne.s32.totalorder %s205, %s206
      %p218 = scmp.eq.s32.totalorder %s28, 1
      %p219 = por %p217, %p218
      %p221 = scmp.ne.s32.totalorder %s206, %s220
      %p222 = scmp.eq.s32.totalorder %s28, 0
      %p223 = por %p221, %p222
      %s225 = sadd.s32 %s224, 1
      %p228 = scmp.eq.s32.totalorder %s22, 1
      %p229 = scmp.ne.s32.totalorder %s224, %s226
      %p230 = scmp.eq.s32.totalorder %s22, 0
      %p231 = por %p229, %p230
      %p232 = scmp.ne.s32.totalorder %s224, %s226
      %p233 = scmp.eq.s32.totalorder %s27, 1
      %p234 = por %p232, %p233
      %p235 = scmp.ne.s32.totalorder %s226, %s227
      %p236 = scmp.eq.s32.totalorder %s27, 0
      %p237 = por %p235, %p236
      %p238 = scmp.ne.s32.totalorder %s226, %s227
      %p239 = scmp.eq.s32.totalorder %s28, 1
      %p240 = por %p238, %p239
      %p242 = scmp.ne.s32.totalorder %s227, %s241
      %p243 = scmp.eq.s32.totalorder %s28, 0
      %p244 = por %p242, %p243
      %s246 = sadd.s32 %s245, 1
      %p249 = scmp.eq.s32.totalorder %s22, 1
      %p250 = scmp.ne.s32.totalorder %s245, %s247
      %p251 = scmp.eq.s32.totalorder %s22, 0
      %p252 = por %p250, %p251
      %p253 = scmp.ne.s32.totalorder %s245, %s247
      %p254 = scmp.eq.s32.totalorder %s27, 1
      %p255 = por %p253, %p254
      %p256 = scmp.ne.s32.totalorder %s247, %s248
      %p257 = scmp.eq.s32.totalorder %s27, 0
      %p258 = por %p256, %p257
      %p259 = scmp.ne.s32.totalorder %s247, %s248
      %p260 = scmp.eq.s32.totalorder %s28, 1
      %p261 = por %p259, %p260
      %p263 = scmp.ne.s32.totalorder %s248, %s262
      %p264 = scmp.eq.s32.totalorder %s28, 0
      %p265 = por %p263, %p264
      %s267 = sadd.s32 %s266, 1
      %p270 = scmp.eq.s32.totalorder %s22, 1
      %p271 = scmp.ne.s32.totalorder %s266, %s268
      %p272 = scmp.eq.s32.totalorder %s22, 0
      %p273 = por %p271, %p272
      %p274 = scmp.ne.s32.totalorder %s266, %s268
      %p275 = scmp.eq.s32.totalorder %s27, 1
      %p276 = por %p274, %p275
      %p277 = scmp.ne.s32.totalorder %s268, %s269
      %p278 = scmp.eq.s32.totalorder %s27, 0
      %p279 = por %p277, %p278
      %p280 = scmp.ne.s32.totalorder %s268, %s269
      %p281 = scmp.eq.s32.totalorder %s28, 1
      %p282 = por %p280, %p281
      %p284 = scmp.ne.s32.totalorder %s269, %s283
      %p285 = scmp.eq.s32.totalorder %s28, 0
      %p286 = por %p284, %p285
      %s288 = sadd.s32 %s287, 1
      %p291 = scmp.eq.s32.totalorder %s22, 1
      %p292 = scmp.ne.s32.totalorder %s287, %s289
      %p293 = scmp.eq.s32.totalorder %s22, 0
      %p294 = por %p292, %p293
      %p295 = scmp.ne.s32.totalorder %s287, %s289
      %p296 = scmp.eq.s32.totalorder %s27, 1
      %p297 = por %p295, %p296
      %p298 = scmp.ne.s32.totalorder %s289, %s290
      %p299 = scmp.eq.s32.totalorder %s27, 0
      %p300 = por %p298, %p299
      %p301 = scmp.ne.s32.totalorder %s289, %s290
      %p302 = scmp.eq.s32.totalorder %s28, 1
      %p303 = por %p301, %p302
      %p305 = scmp.ne.s32.totalorder %s290, %s304
      %p306 = scmp.eq.s32.totalorder %s28, 0
      %p307 = por %p305, %p306
      %s308 = ssub.s32 %s22, %s29
      %p309 = scmp.eq.s32.totalorder %s308, 0
      %s311 = sadd.s32 %s310, 1
      %s312 = scalar_select %p309, %s310, %s311
      %p315 = pneg %p309
      %p316 = scmp.eq.s32.totalorder %s22, 1
      %p317 = por %p315, %p316
      %p318 = scmp.ne.s32.totalorder %s310, %s313
      %p319 = scmp.eq.s32.totalorder %s22, 0
      %p320 = por %p318, %p319
      %p321 = scmp.ne.s32.totalorder %s310, %s313
      %p322 = scmp.eq.s32.totalorder %s27, 1
      %p323 = por %p321, %p322
      %p324 = scmp.ne.s32.totalorder %s313, %s314
      %p325 = scmp.eq.s32.totalorder %s27, 0
      %p326 = por %p324, %p325
      %p327 = scmp.ne.s32.totalorder %s313, %s314
      %p328 = scmp.eq.s32.totalorder %s28, 1
      %p329 = por %p327, %p328
      %p331 = scmp.ne.s32.totalorder %s314, %s330
      %p332 = scmp.eq.s32.totalorder %s28, 0
      %p333 = por %p331, %p332
      %p334 = scmp.le.s32.totalorder 1, %s22
      %p335 = scmp.lt.s32.totalorder %s22, 3
      %p336 = pnand %p334, %p335
      %p337 = pneg %p336
      // Predicated region
      $region9: #{tpu_custom_call.1} parent=5 // pred_check
        _
      $region10: #{tpu_custom_call.1} parent=5 // pred_check_branch
        %339 = sbr.rel (%p336) target = $region12
      $region11: #{tpu_custom_call.1} parent=5 // pred_region
        %s340 = ssub.s32 %s22, 1
        // Predicated region
        $region13: #{tpu_custom_call.1} parent=11 // pred_check
          %p341 = pneg %p69
        $region14: #{tpu_custom_call.1} parent=11 // pred_check_branch
          %343 = sbr.rel (%p341) target = $region16
        $region15: #{tpu_custom_call.1} parent=11 // pred_region
          _
        $region16: #{tpu_custom_call.1} parent=11 // pred_fallthru
          _
        // Predicated region
        $region17: #{tpu_custom_call.1} parent=11 // pred_check
          %p344 = pneg %p90
        $region18: #{tpu_custom_call.1} parent=11 // pred_check_branch
          %346 = sbr.rel (%p344) target = $region20
        $region19: #{tpu_custom_call.1} parent=11 // pred_region
          _
        $region20: #{tpu_custom_call.1} parent=11 // pred_fallthru
          _
        // Predicated region
        $region21: #{tpu_custom_call.1} parent=11 // pred_check
          %p347 = pneg %p111
        $region22: #{tpu_custom_call.1} parent=11 // pred_check_branch
          %349 = sbr.rel (%p347) target = $region24
        $region23: #{tpu_custom_call.1} parent=11 // pred_region
          _
        $region24: #{tpu_custom_call.1} parent=11 // pred_fallthru
          _
        // Predicated region
        $region25: #{tpu_custom_call.1} parent=11 // pred_check
          %p350 = pneg %p132
        $region26: #{tpu_custom_call.1} parent=11 // pred_check_branch
          %352 = sbr.rel (%p350) target = $region28
        $region27: #{tpu_custom_call.1} parent=11 // pred_region
          _
        $region28: #{tpu_custom_call.1} parent=11 // pred_fallthru
          _
        // Predicated region
        $region29: #{tpu_custom_call.1} parent=11 // pred_check
          %p353 = pneg %p153
        $region30: #{tpu_custom_call.1} parent=11 // pred_check_branch
          %355 = sbr.rel (%p353) target = $region32
        $region31: #{tpu_custom_call.1} parent=11 // pred_region
          _
        $region32: #{tpu_custom_call.1} parent=11 // pred_fallthru
          _
        // Predicated region
        $region33: #{tpu_custom_call.1} parent=11 // pred_check
          %p356 = pneg %p174
        $region34: #{tpu_custom_call.1} parent=11 // pred_check_branch
          %358 = sbr.rel (%p356) target = $region36
        $region35: #{tpu_custom_call.1} parent=11 // pred_region
          _
        $region36: #{tpu_custom_call.1} parent=11 // pred_fallthru
          _
        // Predicated region
        $region37: #{tpu_custom_call.1} parent=11 // pred_check
          %p359 = pneg %p195
        $region38: #{tpu_custom_call.1} parent=11 // pred_check_branch
          %361 = sbr.rel (%p359) target = $region40
        $region39: #{tpu_custom_call.1} parent=11 // pred_region
          _
        $region40: #{tpu_custom_call.1} parent=11 // pred_fallthru
          _
        // Predicated region
        $region41: #{tpu_custom_call.1} parent=11 // pred_check
          %p362 = pneg %p216
        $region42: #{tpu_custom_call.1} parent=11 // pred_check_branch
          %364 = sbr.rel (%p362) target = $region44
        $region43: #{tpu_custom_call.1} parent=11 // pred_region
          _
        $region44: #{tpu_custom_call.1} parent=11 // pred_fallthru
          _
        // Predicated region
        $region45: #{tpu_custom_call.1} parent=11 // pred_check
          %p365 = pneg %p237
        $region46: #{tpu_custom_call.1} parent=11 // pred_check_branch
          %367 = sbr.rel (%p365) target = $region48
        $region47: #{tpu_custom_call.1} parent=11 // pred_region
          _
        $region48: #{tpu_custom_call.1} parent=11 // pred_fallthru
          _
        // Predicated region
        $region49: #{tpu_custom_call.1} parent=11 // pred_check
          %p368 = pneg %p258
        $region50: #{tpu_custom_call.1} parent=11 // pred_check_branch
          %370 = sbr.rel (%p368) target = $region52
        $region51: #{tpu_custom_call.1} parent=11 // pred_region
          _
        $region52: #{tpu_custom_call.1} parent=11 // pred_fallthru
          _
        // Predicated region
        $region53: #{tpu_custom_call.1} parent=11 // pred_check
          %p371 = pneg %p279
        $region54: #{tpu_custom_call.1} parent=11 // pred_check_branch
          %373 = sbr.rel (%p371) target = $region56
        $region55: #{tpu_custom_call.1} parent=11 // pred_region
          _
        $region56: #{tpu_custom_call.1} parent=11 // pred_fallthru
          _
        // Predicated region
        $region57: #{tpu_custom_call.1} parent=11 // pred_check
          %p374 = pneg %p300
        $region58: #{tpu_custom_call.1} parent=11 // pred_check_branch
          %376 = sbr.rel (%p374) target = $region60
        $region59: #{tpu_custom_call.1} parent=11 // pred_region
          _
        $region60: #{tpu_custom_call.1} parent=11 // pred_fallthru
          _
      $region12: #{tpu_custom_call.1} parent=5 // pred_fallthru
        _
      %p377 = scmp.lt.s32.totalorder %s22, 2
      // Predicated region
      $region61: #{tpu_custom_call.1} parent=5 // pred_check
        %p378 = pneg %p377
      $region62: #{tpu_custom_call.1} parent=5 // pred_check_branch
        %380 = sbr.rel (%p378) target = $region64
      $region63: #{tpu_custom_call.1} parent=5 // pred_region
        // Predicated region
        $region65: #{tpu_custom_call.1} parent=63 // pred_check
          %p381 = pneg %p42
        $region66: #{tpu_custom_call.1} parent=63 // pred_check_branch
          %383 = sbr.rel (%p381) target = $region68
        $region67: #{tpu_custom_call.1} parent=63 // pred_region
          %p384 = scmp.lt.s32.totalorder %s22, 1
          %s385 = scalar_select %p384, %s22, 1
          %s386 = smul.addr %s385, 8
          %s387 = scalar_lea.vmem %s0, %s386
        $region68: #{tpu_custom_call.1} parent=63 // pred_fallthru
          _
      $region64: #{tpu_custom_call.1} parent=5 // pred_fallthru
        _
      %p388 = scmp.le.s32.totalorder 1, %s22
      %p389 = scmp.lt.s32.totalorder %s22, 3
      %p390 = pnand %p388, %p389
      %p391 = pneg %p390
      // Predicated region
      $region69: #{tpu_custom_call.1} parent=5 // pred_check
        _
      $region70: #{tpu_custom_call.1} parent=5 // pred_check_branch
        %393 = sbr.rel (%p390) target = $region72
      $region71: #{tpu_custom_call.1} parent=5 // pred_region
        %s394 = ssub.s32 %s22, 1
        %p395 = scmp.lt.s32.totalorder %s27, 1
        %s396 = scalar_select %p395, %s27, 1
        %s397 = smul.addr %s396, 8
        %s398 = scalar_lea.vmem %s0, %s397
        %p399 = pneg %p48
        %p400 = pneg %p45
        %p401 = pneg %p69
        %p402 = pneg %p66
        %p403 = pneg %p90
        %p404 = pneg %p87
        %p405 = pneg %p111
        %p406 = pneg %p108
        %p407 = pneg %p132
        %p408 = pneg %p129
        %p409 = pneg %p153
        %p410 = pneg %p150
        %p411 = pneg %p174
        %p412 = pneg %p171
        %p413 = pneg %p195
        %p414 = pneg %p192
        %p415 = pneg %p216
        %p416 = pneg %p213
        %p417 = pneg %p237
        %p418 = pneg %p234
        %p419 = pneg %p258
        %p420 = pneg %p255
        %p421 = pneg %p279
        %p422 = pneg %p276
        %p423 = pneg %p300
        %p424 = pneg %p297
        %p425 = pneg %p326
        %p426 = pneg %p323
        %s427 = sand.u32 %s313, 1
        %s428 = scalar_lea.sflag [#allocation3], %s427
        %s429 = sand.u32 %s313, 1
        %s430 = smul.addr %s429, 8
        %s431 = scalar_lea.vmem [#allocation2], %s430
        %p432 = scmp.lt.s32.totalorder %s27, 1
        %s433 = scalar_select %p432, %s27, 1
        %s434 = smul.addr %s433, 8
        %s435 = scalar_lea.vmem %s0, %s434
        %v437 = vld [vmem:[%s3] sm:$0xf]
        %v438 = vld [vmem:[%s3 + $0x4] sm:$0xf]
        %v439 = vld [vmem:[%s3 + $0x8] sm:$0xf]
        %v440 = vld [vmem:[%s3 + $0xc] sm:$0xf]
        %v441 = vld [vmem:[%s3 + $0x10] sm:$0xf]
        %v442 = vld [vmem:[%s3 + $0x14] sm:$0xf]
        %v443 = vld [vmem:[%s3 + $0x18] sm:$0xf]
        %v444 = vld [vmem:[%s3 + $0x1c] sm:$0xf]
        %v445 = vld [vmem:[%s3 + $0x20] sm:$0xf]
        %v446 = vld [vmem:[%s3 + $0x24] sm:$0xf]
        %v447 = vld [vmem:[%s3 + $0x28] sm:$0xf]
        %v448 = vld [vmem:[%s3 + $0x2c] sm:$0xf]
        %v449 = vld [vmem:[%s3 + $0x30] sm:$0xf]
        %v450 = vld [vmem:[%s3 + $0x34] sm:$0xf]
        %v451 = vld [vmem:[%s3 + $0x38] sm:$0xf]
        %v452 = vld [vmem:[%s3 + $0x3c] sm:$0xf]
        %v453 = vld [vmem:[%s3 + $0x40] sm:$0xf]
        %v454 = vld [vmem:[%s3 + $0x44] sm:$0xf]
        %v455 = vld [vmem:[%s3 + $0x48] sm:$0xf]
        %v456 = vld [vmem:[%s3 + $0x4c] sm:$0xf]
        %v457 = vld [vmem:[%s3 + $0x50] sm:$0xf]
        %v458 = vld [vmem:[%s3 + $0x54] sm:$0xf]
        %v459 = vld [vmem:[%s3 + $0x58] sm:$0xf]
        %v460 = vld [vmem:[%s3 + $0x5c] sm:$0xf]
        %v461 = vld [vmem:[%s3 + $0x60] sm:$0xf]
        %v462 = vld [vmem:[%s3 + $0x64] sm:$0xf]
        %v463 = vld [vmem:[%s3 + $0x68] sm:$0xf]
        %v464 = vld [vmem:[%s3 + $0x6c] sm:$0xf]
        %v465 = vld [vmem:[%s3 + $0x70] sm:$0xf]
        %v466 = vld [vmem:[%s3 + $0x74] sm:$0xf]
        %v467 = vld [vmem:[%s3 + $0x78] sm:$0xf]
        %v468 = vld [vmem:[%s3 + $0x7c] sm:$0xf]
        %v469 = vld [vmem:[%s3 + $0x80] sm:$0xf]
        %v470 = vld [vmem:[%s3 + $0x84] sm:$0xf]
        %v471 = vld [vmem:[%s3 + $0x88] sm:$0xf]
        %v472 = vld [vmem:[%s3 + $0x8c] sm:$0xf]
        %v473 = vld [vmem:[%s3 + $0x90] sm:$0xf]
        %v474 = vld [vmem:[%s3 + $0x94] sm:$0xf]
        %v475 = vld [vmem:[%s3 + $0x98] sm:$0xf]
        %v476 = vld [vmem:[%s3 + $0x9c] sm:$0xf]
        %v477 = vld [vmem:[%s3 + $0xa0] sm:$0xf]
        %v478 = vld [vmem:[%s3 + $0xa4] sm:$0xf]
        %v479 = vld [vmem:[%s3 + $0xa8] sm:$0xf]
        %v480 = vld [vmem:[%s3 + $0xac] sm:$0xf]
        %v481 = vld [vmem:[%s3 + $0xb0] sm:$0xf]
        %v482 = vld [vmem:[%s3 + $0xb4] sm:$0xf]
        %v483 = vld [vmem:[%s3 + $0xb8] sm:$0xf]
        %v484 = vld [vmem:[%s3 + $0xbc] sm:$0xf]
        %v485 = vld [vmem:[%s5] sm:$0xf]
        %v486 = vld [vmem:[%s5 + $0x4] sm:$0xf]
        %v487 = vld [vmem:[%s5 + $0x8] sm:$0xf]
        %v488 = vld [vmem:[%s5 + $0xc] sm:$0xf]
        %v489 = vld [vmem:[%s9] sm:$0xf]
        %v490 = vld [vmem:[%s9 + $0x4] sm:$0xf]
        %v491 = vld [vmem:[%s9 + $0x8] sm:$0xf]
        %v492 = vld [vmem:[%s9 + $0xc] sm:$0xf]
        %v493 = vld [vmem:[%s11] sm:$0xf]
        %v494 = vld [vmem:[%s11 + $0x4] sm:$0xf]
        %v495 = vld [vmem:[%s11 + $0x8] sm:$0xf]
        %v496 = vld [vmem:[%s11 + $0xc] sm:$0xf]
        %v497 = vld [vmem:[%s11 + $0x10] sm:$0xf]
        %v498 = vld [vmem:[%s11 + $0x14] sm:$0xf]
        %v499 = vld [vmem:[%s11 + $0x18] sm:$0xf]
        %v500 = vld [vmem:[%s11 + $0x1c] sm:$0xf]
        %v501 = vld [vmem:[%s1] sm:$0x1]
        %v503 = vlaneseq
        %v504 = vshrl.u32 %v503, 7
        %v505 = vsub.s32 0, %v504
        %v506 = vrot.slane %v501, %v505
        %v508 = vld [vmem:[%s2] sm:$0x1]
        %v510 = vlaneseq
        %v511 = vshrl.u32 %v510, 7
        %v512 = vsub.s32 0, %v511
        %v513 = vrot.slane %v508, %v512
        %v515 = vld [vmem:[%s7] sm:$0x1]
        %v517 = vlaneseq
        %v518 = vshrl.u32 %v517, 7
        %v519 = vsub.s32 0, %v518
        %v520 = vrot.slane %v515, %v519
        %v522 = vld [vmem:[%s8] sm:$0x1]
        %v524 = vlaneseq
        %v525 = vshrl.u32 %v524, 7
        %v526 = vsub.s32 0, %v525
        %v527 = vrot.slane %v522, %v526
        %v529 = vld [vmem:[%s4] sm:$0x1]
        %v530 = vld [vmem:[%s4 + $0x1] sm:$0x1]
        %v531 = vld [vmem:[%s4 + $0x2] sm:$0x1]
        %v532 = vld [vmem:[%s4 + $0x3] sm:$0x1]
        %v533 = vld [vmem:[%s4 + $0x4] sm:$0x1]
        %v534 = vld [vmem:[%s4 + $0x5] sm:$0x1]
        %v535 = vld [vmem:[%s4 + $0x6] sm:$0x1]
        %v536 = vld [vmem:[%s4 + $0x7] sm:$0x1]
        %v537 = vld [vmem:[%s4 + $0x8] sm:$0x1]
        %v538 = vld [vmem:[%s4 + $0x9] sm:$0x1]
        %v539 = vld [vmem:[%s4 + $0xa] sm:$0x1]
        %v540 = vld [vmem:[%s4 + $0xb] sm:$0x1]
        %v553 = vlaneseq
        %v554 = vshrl.u32 %v553, 7
        %v555 = vsub.s32 0, %v554
        %v556 = vrot.slane %v529, %v555
        %v557 = vlaneseq
        %v558 = vshrl.u32 %v557, 7
        %v559 = vsub.s32 0, %v558
        %v560 = vrot.slane %v530, %v559
        %v561 = vlaneseq
        %v562 = vshrl.u32 %v561, 7
        %v563 = vsub.s32 0, %v562
        %v564 = vrot.slane %v531, %v563
        %v565 = vlaneseq
        %v566 = vshrl.u32 %v565, 7
        %v567 = vsub.s32 0, %v566
        %v568 = vrot.slane %v532, %v567
        %v569 = vlaneseq
        %v570 = vshrl.u32 %v569, 7
        %v571 = vsub.s32 0, %v570
        %v572 = vrot.slane %v533, %v571
        %v573 = vlaneseq
        %v574 = vshrl.u32 %v573, 7
        %v575 = vsub.s32 0, %v574
        %v576 = vrot.slane %v534, %v575
        %v577 = vlaneseq
        %v578 = vshrl.u32 %v577, 7
        %v579 = vsub.s32 0, %v578
        %v580 = vrot.slane %v535, %v579
        %v581 = vlaneseq
        %v582 = vshrl.u32 %v581, 7
        %v583 = vsub.s32 0, %v582
        %v584 = vrot.slane %v536, %v583
        %v585 = vlaneseq
        %v586 = vshrl.u32 %v585, 7
        %v587 = vsub.s32 0, %v586
        %v588 = vrot.slane %v537, %v587
        %v589 = vlaneseq
        %v590 = vshrl.u32 %v589, 7
        %v591 = vsub.s32 0, %v590
        %v592 = vrot.slane %v538, %v591
        %v593 = vlaneseq
        %v594 = vshrl.u32 %v593, 7
        %v595 = vsub.s32 0, %v594
        %v596 = vrot.slane %v539, %v595
        %v597 = vlaneseq
        %v598 = vshrl.u32 %v597, 7
        %v599 = vsub.s32 0, %v598
        %v600 = vrot.slane %v540, %v599
        %v613 = vld [vmem:[%s6] sm:$0x1]
        %v615 = vlaneseq
        %v616 = vshrl.u32 %v615, 7
        %v617 = vsub.s32 0, %v616
        %v618 = vrot.slane %v613, %v617
        %v620 = vld [vmem:[%s10] sm:$0x1]
        %v622 = vlaneseq
        %v623 = vshrl.u32 %v622, 7
        %v624 = vsub.s32 0, %v623
        %v625 = vrot.slane %v620, %v624
        %v627 = vld [vmem:[%s12] sm:$0x1]
        %v629 = vlaneseq
        %v630 = vshrl.u32 %v629, 7
        %v631 = vsub.s32 0, %v630
        %v632 = vrot.slane %v627, %v631
        %v634 = vld [vmem:[%s435] sm:$0xff]
        loop: start=0, step=1, limit=2
        $region73: #{tpu_custom_call.1} parent=71 // loop_pre_header
          _
        $region74: #{tpu_custom_call.1} parent=71 // loop_header
          %s636 = sphi 0, %s640
          %p637 = scmp.ge.s32.totalorder %s636, 2
          %v641 = vphi %v634, %v2055
        $region75: #{tpu_custom_call.1} parent=71 // loop_header_branch
          %639 = sbr.rel (%p637) target = $region79
        $region76: #{tpu_custom_call.1} parent=71 // loop_body
          %vm642 = vcmask 261120
          %v643 = vsel %vm642, %v641, 0.0
          %644 = vadd.xlane.f32.xlu0 %v643
          %v645 = vpop.xlane.xlu0 %644
          %v646 = vrcp.pop 32.0
          %v647 = vmul.f32 %v645, %v646
          %v648 = vsub.f32 %v641, %v647
          %v649 = vmul.f32 %v648, %v648
          %v650 = vsel %vm642, %v649, 0.0
          %651 = vadd.xlane.f32.xlu0 %v650
          %v652 = vpop.xlane.xlu0 %651
          %v653 = vmul.f32 %v652, %v646
          %v654 = vadd.f32 %v653, 1e-05
          %v655 = vrsqrt.pop %v654
          %v656 = vmul.f32 %v648, %v655
          %v657 = vmul.f32 %v656, %v506
          %v658 = vadd.f32 %v657, %v513
          %v659 = vpack.c.bf16 %v658, %v658
          %v664 = vunpack.c.l.b16 %v437
          %v665 = vunpack.c.l.b16 %v438
          %v666 = vunpack.c.l.b16 %v439
          %v667 = vunpack.c.l.b16 %v440
          %v668 = vpack.c.b16 %v665, %v664
          %v669 = vpack.c.b16 %v667, %v666
          %v673 = vsel %vm642, %v659, 0
          %675 = vmatprep.subr.bf16.mxu0 0
          %676 = vmatpush1.bf16.msra.mxu0 %v668
          %677 = vmatprep.subr.bf16.mxu0 0
          %678 = vmatpush1.bf16.msra.mxu0 %v669
          %679 = vmatprep.subr.bf16.mxu0 0
          %680 = vmatpush1.bf16.msra.mxu0 0
          %681 = vmatprep.subr.bf16.mxu0 0
          %682 = vmatpush1.bf16.msra.mxu0 0
          %683 = vmatprep.subr.bf16.mxu0 0
          %684 = vmatpush1.bf16.msra.mxu0 0
          %685 = vmatprep.subr.bf16.mxu0 0
          %686 = vmatpush1.bf16.msra.mxu0 0
          %687 = vmatprep.subr.bf16.mxu0 0
          %688 = vmatpush1.bf16.msra.mxu0 0
          %689 = vmatprep.subr.bf16.mxu0 0
          %690 = vmatpush1.bf16.msra.mxu0 0
          %691 = vmatprep.subr.bf16.mxu0 0
          %692 = vmatpush1.bf16.msra.mxu0 0
          %693 = vmatprep.subr.bf16.mxu0 0
          %694 = vmatpush1.bf16.msra.mxu0 0
          %695 = vmatprep.subr.bf16.mxu0 0
          %696 = vmatpush1.bf16.msra.mxu0 0
          %697 = vmatprep.subr.bf16.mxu0 0
          %698 = vmatpush1.bf16.msra.mxu0 0
          %699 = vmatprep.subr.bf16.mxu0 0
          %700 = vmatpush1.bf16.msra.mxu0 0
          %701 = vmatprep.subr.bf16.mxu0 0
          %702 = vmatpush1.bf16.msra.mxu0 0
          %703 = vmatprep.subr.bf16.mxu0 0
          %704 = vmatpush1.bf16.msra.mxu0 0
          %705 = vmatprep.subr.bf16.mxu0 0
          %706 = vmatpush1.bf16.msra.mxu0 0
          %707 = vmatprep.mubr.bf16.mxu0 0
          %708 = vmatmul.mubr.bf16.gmra.mrb[0].mxu0 %v673
          %v709 = vpop.f32.mrb[0].mxu0
          %v710 = vadd.f32 %v556, %v709
          %v711 = vpop.f32.mrb[0].mxu0
          %v712 = vpop.f32.mrb[0].mxu0
          %v713 = vpop.f32.mrb[0].mxu0
          %714 = vdwg.mxu0
          %v719 = vunpack.c.l.b16 %v441
          %v720 = vunpack.c.l.b16 %v442
          %v721 = vunpack.c.l.b16 %v443
          %v722 = vunpack.c.l.b16 %v444
          %v723 = vpack.c.b16 %v720, %v719
          %v724 = vpack.c.b16 %v722, %v721
          %727 = vmatprep.subr.bf16.mxu0 0
          %728 = vmatpush1.bf16.msra.mxu0 %v723
          %729 = vmatprep.subr.bf16.mxu0 0
          %730 = vmatpush1.bf16.msra.mxu0 %v724
          %731 = vmatprep.subr.bf16.mxu0 0
          %732 = vmatpush1.bf16.msra.mxu0 0
          %733 = vmatprep.subr.bf16.mxu0 0
          %734 = vmatpush1.bf16.msra.mxu0 0
          %735 = vmatprep.subr.bf16.mxu0 0
          %736 = vmatpush1.bf16.msra.mxu0 0
          %737 = vmatprep.subr.bf16.mxu0 0
          %738 = vmatpush1.bf16.msra.mxu0 0
          %739 = vmatprep.subr.bf16.mxu0 0
          %740 = vmatpush1.bf16.msra.mxu0 0
          %741 = vmatprep.subr.bf16.mxu0 0
          %742 = vmatpush1.bf16.msra.mxu0 0
          %743 = vmatprep.subr.bf16.mxu0 0
          %744 = vmatpush1.bf16.msra.mxu0 0
          %745 = vmatprep.subr.bf16.mxu0 0
          %746 = vmatpush1.bf16.msra.mxu0 0
          %747 = vmatprep.subr.bf16.mxu0 0
          %748 = vmatpush1.bf16.msra.mxu0 0
          %749 = vmatprep.subr.bf16.mxu0 0
          %750 = vmatpush1.bf16.msra.mxu0 0
          %751 = vmatprep.subr.bf16.mxu0 0
          %752 = vmatpush1.bf16.msra.mxu0 0
          %753 = vmatprep.subr.bf16.mxu0 0
          %754 = vmatpush1.bf16.msra.mxu0 0
          %755 = vmatprep.subr.bf16.mxu0 0
          %756 = vmatpush1.bf16.msra.mxu0 0
          %757 = vmatprep.subr.bf16.mxu0 0
          %758 = vmatpush1.bf16.msra.mxu0 0
          %759 = vmatprep.mubr.bf16.mxu0 0
          %760 = vmatmul.mubr.bf16.gmra.mrb[0].mxu0 %v673
          %v761 = vpop.f32.mrb[0].mxu0
          %v762 = vadd.f32 %v560, %v761
          %v763 = vpop.f32.mrb[0].mxu0
          %v764 = vpop.f32.mrb[0].mxu0
          %v765 = vpop.f32.mrb[0].mxu0
          %766 = vdwg.mxu0
          %v771 = vunpack.c.l.b16 %v445
          %v772 = vunpack.c.l.b16 %v446
          %v773 = vunpack.c.l.b16 %v447
          %v774 = vunpack.c.l.b16 %v448
          %v775 = vpack.c.b16 %v772, %v771
          %v776 = vpack.c.b16 %v774, %v773
          %779 = vmatprep.subr.bf16.mxu0 0
          %780 = vmatpush1.bf16.msra.mxu0 %v775
          %781 = vmatprep.subr.bf16.mxu0 0
          %782 = vmatpush1.bf16.msra.mxu0 %v776
          %783 = vmatprep.subr.bf16.mxu0 0
          %784 = vmatpush1.bf16.msra.mxu0 0
          %785 = vmatprep.subr.bf16.mxu0 0
          %786 = vmatpush1.bf16.msra.mxu0 0
          %787 = vmatprep.subr.bf16.mxu0 0
          %788 = vmatpush1.bf16.msra.mxu0 0
          %789 = vmatprep.subr.bf16.mxu0 0
          %790 = vmatpush1.bf16.msra.mxu0 0
          %791 = vmatprep.subr.bf16.mxu0 0
          %792 = vmatpush1.bf16.msra.mxu0 0
          %793 = vmatprep.subr.bf16.mxu0 0
          %794 = vmatpush1.bf16.msra.mxu0 0
          %795 = vmatprep.subr.bf16.mxu0 0
          %796 = vmatpush1.bf16.msra.mxu0 0
          %797 = vmatprep.subr.bf16.mxu0 0
          %798 = vmatpush1.bf16.msra.mxu0 0
          %799 = vmatprep.subr.bf16.mxu0 0
          %800 = vmatpush1.bf16.msra.mxu0 0
          %801 = vmatprep.subr.bf16.mxu0 0
          %802 = vmatpush1.bf16.msra.mxu0 0
          %803 = vmatprep.subr.bf16.mxu0 0
          %804 = vmatpush1.bf16.msra.mxu0 0
          %805 = vmatprep.subr.bf16.mxu0 0
          %806 = vmatpush1.bf16.msra.mxu0 0
          %807 = vmatprep.subr.bf16.mxu0 0
          %808 = vmatpush1.bf16.msra.mxu0 0
          %809 = vmatprep.subr.bf16.mxu0 0
          %810 = vmatpush1.bf16.msra.mxu0 0
          %811 = vmatprep.mubr.bf16.mxu0 0
          %812 = vmatmul.mubr.bf16.gmra.mrb[0].mxu0 %v673
          %v813 = vpop.f32.mrb[0].mxu0
          %v814 = vadd.f32 %v564, %v813
          %v815 = vpop.f32.mrb[0].mxu0
          %v816 = vpop.f32.mrb[0].mxu0
          %v817 = vpop.f32.mrb[0].mxu0
          %818 = vdwg.mxu0
          %v823 = vunpack.c.l.b16 %v449
          %v824 = vunpack.c.l.b16 %v450
          %v825 = vunpack.c.l.b16 %v451
          %v826 = vunpack.c.l.b16 %v452
          %v827 = vpack.c.b16 %v824, %v823
          %v828 = vpack.c.b16 %v826, %v825
          %831 = vmatprep.subr.bf16.mxu0 0
          %832 = vmatpush1.bf16.msra.mxu0 %v827
          %833 = vmatprep.subr.bf16.mxu0 0
          %834 = vmatpush1.bf16.msra.mxu0 %v828
          %835 = vmatprep.subr.bf16.mxu0 0
          %836 = vmatpush1.bf16.msra.mxu0 0
          %837 = vmatprep.subr.bf16.mxu0 0
          %838 = vmatpush1.bf16.msra.mxu0 0
          %839 = vmatprep.subr.bf16.mxu0 0
          %840 = vmatpush1.bf16.msra.mxu0 0
          %841 = vmatprep.subr.bf16.mxu0 0
          %842 = vmatpush1.bf16.msra.mxu0 0
          %843 = vmatprep.subr.bf16.mxu0 0
          %844 = vmatpush1.bf16.msra.mxu0 0
          %845 = vmatprep.subr.bf16.mxu0 0
          %846 = vmatpush1.bf16.msra.mxu0 0
          %847 = vmatprep.subr.bf16.mxu0 0
          %848 = vmatpush1.bf16.msra.mxu0 0
          %849 = vmatprep.subr.bf16.mxu0 0
          %850 = vmatpush1.bf16.msra.mxu0 0
          %851 = vmatprep.subr.bf16.mxu0 0
          %852 = vmatpush1.bf16.msra.mxu0 0
          %853 = vmatprep.subr.bf16.mxu0 0
          %854 = vmatpush1.bf16.msra.mxu0 0
          %855 = vmatprep.subr.bf16.mxu0 0
          %856 = vmatpush1.bf16.msra.mxu0 0
          %857 = vmatprep.subr.bf16.mxu0 0
          %858 = vmatpush1.bf16.msra.mxu0 0
          %859 = vmatprep.subr.bf16.mxu0 0
          %860 = vmatpush1.bf16.msra.mxu0 0
          %861 = vmatprep.subr.bf16.mxu0 0
          %862 = vmatpush1.bf16.msra.mxu0 0
          %863 = vmatprep.mubr.bf16.mxu0 0
          %864 = vmatmul.mubr.bf16.gmra.mrb[0].mxu0 %v673
          %v865 = vpop.f32.mrb[0].mxu0
          %v866 = vadd.f32 %v568, %v865
          %v867 = vpop.f32.mrb[0].mxu0
          %v868 = vpop.f32.mrb[0].mxu0
          %v869 = vpop.f32.mrb[0].mxu0
          %870 = vdwg.mxu0
          %v875 = vunpack.c.l.b16 %v453
          %v876 = vunpack.c.l.b16 %v454
          %v877 = vunpack.c.l.b16 %v455
          %v878 = vunpack.c.l.b16 %v456
          %v879 = vpack.c.b16 %v876, %v875
          %v880 = vpack.c.b16 %v878, %v877
          %883 = vmatprep.subr.bf16.mxu0 0
          %884 = vmatpush1.bf16.msra.mxu0 %v879
          %885 = vmatprep.subr.bf16.mxu0 0
          %886 = vmatpush1.bf16.msra.mxu0 %v880
          %887 = vmatprep.subr.bf16.mxu0 0
          %888 = vmatpush1.bf16.msra.mxu0 0
          %889 = vmatprep.subr.bf16.mxu0 0
          %890 = vmatpush1.bf16.msra.mxu0 0
          %891 = vmatprep.subr.bf16.mxu0 0
          %892 = vmatpush1.bf16.msra.mxu0 0
          %893 = vmatprep.subr.bf16.mxu0 0
          %894 = vmatpush1.bf16.msra.mxu0 0
          %895 = vmatprep.subr.bf16.mxu0 0
          %896 = vmatpush1.bf16.msra.mxu0 0
          %897 = vmatprep.subr.bf16.mxu0 0
          %898 = vmatpush1.bf16.msra.mxu0 0
          %899 = vmatprep.subr.bf16.mxu0 0
          %900 = vmatpush1.bf16.msra.mxu0 0
          %901 = vmatprep.subr.bf16.mxu0 0
          %902 = vmatpush1.bf16.msra.mxu0 0
          %903 = vmatprep.subr.bf16.mxu0 0
          %904 = vmatpush1.bf16.msra.mxu0 0
          %905 = vmatprep.subr.bf16.mxu0 0
          %906 = vmatpush1.bf16.msra.mxu0 0
          %907 = vmatprep.subr.bf16.mxu0 0
          %908 = vmatpush1.bf16.msra.mxu0 0
          %909 = vmatprep.subr.bf16.mxu0 0
          %910 = vmatpush1.bf16.msra.mxu0 0
          %911 = vmatprep.subr.bf16.mxu0 0
          %912 = vmatpush1.bf16.msra.mxu0 0
          %913 = vmatprep.subr.bf16.mxu0 0
          %914 = vmatpush1.bf16.msra.mxu0 0
          %915 = vmatprep.mubr.bf16.mxu0 0
          %916 = vmatmul.mubr.bf16.gmra.mrb[0].mxu0 %v673
          %v917 = vpop.f32.mrb[0].mxu0
          %v918 = vadd.f32 %v572, %v917
          %v919 = vpop.f32.mrb[0].mxu0
          %v920 = vpop.f32.mrb[0].mxu0
          %v921 = vpop.f32.mrb[0].mxu0
          %922 = vdwg.mxu0
          %v927 = vunpack.c.l.b16 %v457
          %v928 = vunpack.c.l.b16 %v458
          %v929 = vunpack.c.l.b16 %v459
          %v930 = vunpack.c.l.b16 %v460
          %v931 = vpack.c.b16 %v928, %v927
          %v932 = vpack.c.b16 %v930, %v929
          %935 = vmatprep.subr.bf16.mxu0 0
          %936 = vmatpush1.bf16.msra.mxu0 %v931
          %937 = vmatprep.subr.bf16.mxu0 0
          %938 = vmatpush1.bf16.msra.mxu0 %v932
          %939 = vmatprep.subr.bf16.mxu0 0
          %940 = vmatpush1.bf16.msra.mxu0 0
          %941 = vmatprep.subr.bf16.mxu0 0
          %942 = vmatpush1.bf16.msra.mxu0 0
          %943 = vmatprep.subr.bf16.mxu0 0
          %944 = vmatpush1.bf16.msra.mxu0 0
          %945 = vmatprep.subr.bf16.mxu0 0
          %946 = vmatpush1.bf16.msra.mxu0 0
          %947 = vmatprep.subr.bf16.mxu0 0
          %948 = vmatpush1.bf16.msra.mxu0 0
          %949 = vmatprep.subr.bf16.mxu0 0
          %950 = vmatpush1.bf16.msra.mxu0 0
          %951 = vmatprep.subr.bf16.mxu0 0
          %952 = vmatpush1.bf16.msra.mxu0 0
          %953 = vmatprep.subr.bf16.mxu0 0
          %954 = vmatpush1.bf16.msra.mxu0 0
          %955 = vmatprep.subr.bf16.mxu0 0
          %956 = vmatpush1.bf16.msra.mxu0 0
          %957 = vmatprep.subr.bf16.mxu0 0
          %958 = vmatpush1.bf16.msra.mxu0 0
          %959 = vmatprep.subr.bf16.mxu0 0
          %960 = vmatpush1.bf16.msra.mxu0 0
          %961 = vmatprep.subr.bf16.mxu0 0
          %962 = vmatpush1.bf16.msra.mxu0 0
          %963 = vmatprep.subr.bf16.mxu0 0
          %964 = vmatpush1.bf16.msra.mxu0 0
          %965 = vmatprep.subr.bf16.mxu0 0
          %966 = vmatpush1.bf16.msra.mxu0 0
          %967 = vmatprep.mubr.bf16.mxu0 0
          %968 = vmatmul.mubr.bf16.gmra.mrb[0].mxu0 %v673
          %v969 = vpop.f32.mrb[0].mxu0
          %v970 = vadd.f32 %v576, %v969
          %v971 = vpop.f32.mrb[0].mxu0
          %v972 = vpop.f32.mrb[0].mxu0
          %v973 = vpop.f32.mrb[0].mxu0
          %974 = vdwg.mxu0
          %v979 = vunpack.c.l.b16 %v461
          %v980 = vunpack.c.l.b16 %v462
          %v981 = vunpack.c.l.b16 %v463
          %v982 = vunpack.c.l.b16 %v464
          %v983 = vpack.c.b16 %v980, %v979
          %v984 = vpack.c.b16 %v982, %v981
          %987 = vmatprep.subr.bf16.mxu0 0
          %988 = vmatpush1.bf16.msra.mxu0 %v983
          %989 = vmatprep.subr.bf16.mxu0 0
          %990 = vmatpush1.bf16.msra.mxu0 %v984
          %991 = vmatprep.subr.bf16.mxu0 0
          %992 = vmatpush1.bf16.msra.mxu0 0
          %993 = vmatprep.subr.bf16.mxu0 0
          %994 = vmatpush1.bf16.msra.mxu0 0
          %995 = vmatprep.subr.bf16.mxu0 0
          %996 = vmatpush1.bf16.msra.mxu0 0
          %997 = vmatprep.subr.bf16.mxu0 0
          %998 = vmatpush1.bf16.msra.mxu0 0
          %999 = vmatprep.subr.bf16.mxu0 0
          %1000 = vmatpush1.bf16.msra.mxu0 0
          %1001 = vmatprep.subr.bf16.mxu0 0
          %1002 = vmatpush1.bf16.msra.mxu0 0
          %1003 = vmatprep.subr.bf16.mxu0 0
          %1004 = vmatpush1.bf16.msra.mxu0 0
          %1005 = vmatprep.subr.bf16.mxu0 0
          %1006 = vmatpush1.bf16.msra.mxu0 0
          %1007 = vmatprep.subr.bf16.mxu0 0
          %1008 = vmatpush1.bf16.msra.mxu0 0
          %1009 = vmatprep.subr.bf16.mxu0 0
          %1010 = vmatpush1.bf16.msra.mxu0 0
          %1011 = vmatprep.subr.bf16.mxu0 0
          %1012 = vmatpush1.bf16.msra.mxu0 0
          %1013 = vmatprep.subr.bf16.mxu0 0
          %1014 = vmatpush1.bf16.msra.mxu0 0
          %1015 = vmatprep.subr.bf16.mxu0 0
          %1016 = vmatpush1.bf16.msra.mxu0 0
          %1017 = vmatprep.subr.bf16.mxu0 0
          %1018 = vmatpush1.bf16.msra.mxu0 0
          %1019 = vmatprep.mubr.bf16.mxu0 0
          %1020 = vmatmul.mubr.bf16.gmra.mrb[0].mxu0 %v673
          %v1021 = vpop.f32.mrb[0].mxu0
          %v1022 = vadd.f32 %v580, %v1021
          %v1023 = vpop.f32.mrb[0].mxu0
          %v1024 = vpop.f32.mrb[0].mxu0
          %v1025 = vpop.f32.mrb[0].mxu0
          %1026 = vdwg.mxu0
          %v1031 = vunpack.c.l.b16 %v465
          %v1032 = vunpack.c.l.b16 %v466
          %v1033 = vunpack.c.l.b16 %v467
          %v1034 = vunpack.c.l.b16 %v468
          %v1035 = vpack.c.b16 %v1032, %v1031
          %v1036 = vpack.c.b16 %v1034, %v1033
          %1039 = vmatprep.subr.bf16.mxu0 0
          %1040 = vmatpush1.bf16.msra.mxu0 %v1035
          %1041 = vmatprep.subr.bf16.mxu0 0
          %1042 = vmatpush1.bf16.msra.mxu0 %v1036
          %1043 = vmatprep.subr.bf16.mxu0 0
          %1044 = vmatpush1.bf16.msra.mxu0 0
          %1045 = vmatprep.subr.bf16.mxu0 0
          %1046 = vmatpush1.bf16.msra.mxu0 0
          %1047 = vmatprep.subr.bf16.mxu0 0
          %1048 = vmatpush1.bf16.msra.mxu0 0
          %1049 = vmatprep.subr.bf16.mxu0 0
          %1050 = vmatpush1.bf16.msra.mxu0 0
          %1051 = vmatprep.subr.bf16.mxu0 0
          %1052 = vmatpush1.bf16.msra.mxu0 0
          %1053 = vmatprep.subr.bf16.mxu0 0
          %1054 = vmatpush1.bf16.msra.mxu0 0
          %1055 = vmatprep.subr.bf16.mxu0 0
          %1056 = vmatpush1.bf16.msra.mxu0 0
          %1057 = vmatprep.subr.bf16.mxu0 0
          %1058 = vmatpush1.bf16.msra.mxu0 0
          %1059 = vmatprep.subr.bf16.mxu0 0
          %1060 = vmatpush1.bf16.msra.mxu0 0
          %1061 = vmatprep.subr.bf16.mxu0 0
          %1062 = vmatpush1.bf16.msra.mxu0 0
          %1063 = vmatprep.subr.bf16.mxu0 0
          %1064 = vmatpush1.bf16.msra.mxu0 0
          %1065 = vmatprep.subr.bf16.mxu0 0
          %1066 = vmatpush1.bf16.msra.mxu0 0
          %1067 = vmatprep.subr.bf16.mxu0 0
          %1068 = vmatpush1.bf16.msra.mxu0 0
          %1069 = vmatprep.subr.bf16.mxu0 0
          %1070 = vmatpush1.bf16.msra.mxu0 0
          %1071 = vmatprep.mubr.bf16.mxu0 0
          %1072 = vmatmul.mubr.bf16.gmra.mrb[0].mxu0 %v673
          %v1073 = vpop.f32.mrb[0].mxu0
          %v1074 = vadd.f32 %v584, %v1073
          %v1075 = vpop.f32.mrb[0].mxu0
          %v1076 = vpop.f32.mrb[0].mxu0
          %v1077 = vpop.f32.mrb[0].mxu0
          %1078 = vdwg.mxu0
          %v1083 = vunpack.c.l.b16 %v469
          %v1084 = vunpack.c.l.b16 %v470
          %v1085 = vunpack.c.l.b16 %v471
          %v1086 = vunpack.c.l.b16 %v472
          %v1087 = vpack.c.b16 %v1084, %v1083
          %v1088 = vpack.c.b16 %v1086, %v1085
          %1091 = vmatprep.subr.bf16.mxu0 0
          %1092 = vmatpush1.bf16.msra.mxu0 %v1087
          %1093 = vmatprep.subr.bf16.mxu0 0
          %1094 = vmatpush1.bf16.msra.mxu0 %v1088
          %1095 = vmatprep.subr.bf16.mxu0 0
          %1096 = vmatpush1.bf16.msra.mxu0 0
          %1097 = vmatprep.subr.bf16.mxu0 0
          %1098 = vmatpush1.bf16.msra.mxu0 0
          %1099 = vmatprep.subr.bf16.mxu0 0
          %1100 = vmatpush1.bf16.msra.mxu0 0
          %1101 = vmatprep.subr.bf16.mxu0 0
          %1102 = vmatpush1.bf16.msra.mxu0 0
          %1103 = vmatprep.subr.bf16.mxu0 0
          %1104 = vmatpush1.bf16.msra.mxu0 0
          %1105 = vmatprep.subr.bf16.mxu0 0
          %1106 = vmatpush1.bf16.msra.mxu0 0
          %1107 = vmatprep.subr.bf16.mxu0 0
          %1108 = vmatpush1.bf16.msra.mxu0 0
          %1109 = vmatprep.subr.bf16.mxu0 0
          %1110 = vmatpush1.bf16.msra.mxu0 0
          %1111 = vmatprep.subr.bf16.mxu0 0
          %1112 = vmatpush1.bf16.msra.mxu0 0
          %1113 = vmatprep.subr.bf16.mxu0 0
          %1114 = vmatpush1.bf16.msra.mxu0 0
          %1115 = vmatprep.subr.bf16.mxu0 0
          %1116 = vmatpush1.bf16.msra.mxu0 0
          %1117 = vmatprep.subr.bf16.mxu0 0
          %1118 = vmatpush1.bf16.msra.mxu0 0
          %1119 = vmatprep.subr.bf16.mxu0 0
          %1120 = vmatpush1.bf16.msra.mxu0 0
          %1121 = vmatprep.subr.bf16.mxu0 0
          %1122 = vmatpush1.bf16.msra.mxu0 0
          %1123 = vmatprep.mubr.bf16.mxu0 0
          %1124 = vmatmul.mubr.bf16.gmra.mrb[0].mxu0 %v673
          %v1125 = vpop.f32.mrb[0].mxu0
          %v1126 = vadd.f32 %v588, %v1125
          %v1127 = vpop.f32.mrb[0].mxu0
          %v1128 = vpop.f32.mrb[0].mxu0
          %v1129 = vpop.f32.mrb[0].mxu0
          %1130 = vdwg.mxu0
          %v1135 = vunpack.c.l.b16 %v473
          %v1136 = vunpack.c.l.b16 %v474
          %v1137 = vunpack.c.l.b16 %v475
          %v1138 = vunpack.c.l.b16 %v476
          %v1139 = vpack.c.b16 %v1136, %v1135
          %v1140 = vpack.c.b16 %v1138, %v1137
          %1143 = vmatprep.subr.bf16.mxu0 0
          %1144 = vmatpush1.bf16.msra.mxu0 %v1139
          %1145 = vmatprep.subr.bf16.mxu0 0
          %1146 = vmatpush1.bf16.msra.mxu0 %v1140
          %1147 = vmatprep.subr.bf16.mxu0 0
          %1148 = vmatpush1.bf16.msra.mxu0 0
          %1149 = vmatprep.subr.bf16.mxu0 0
          %1150 = vmatpush1.bf16.msra.mxu0 0
          %1151 = vmatprep.subr.bf16.mxu0 0
          %1152 = vmatpush1.bf16.msra.mxu0 0
          %1153 = vmatprep.subr.bf16.mxu0 0
          %1154 = vmatpush1.bf16.msra.mxu0 0
          %1155 = vmatprep.subr.bf16.mxu0 0
          %1156 = vmatpush1.bf16.msra.mxu0 0
          %1157 = vmatprep.subr.bf16.mxu0 0
          %1158 = vmatpush1.bf16.msra.mxu0 0
          %1159 = vmatprep.subr.bf16.mxu0 0
          %1160 = vmatpush1.bf16.msra.mxu0 0
          %1161 = vmatprep.subr.bf16.mxu0 0
          %1162 = vmatpush1.bf16.msra.mxu0 0
          %1163 = vmatprep.subr.bf16.mxu0 0
          %1164 = vmatpush1.bf16.msra.mxu0 0
          %1165 = vmatprep.subr.bf16.mxu0 0
          %1166 = vmatpush1.bf16.msra.mxu0 0
          %1167 = vmatprep.subr.bf16.mxu0 0
          %1168 = vmatpush1.bf16.msra.mxu0 0
          %1169 = vmatprep.subr.bf16.mxu0 0
          %1170 = vmatpush1.bf16.msra.mxu0 0
          %1171 = vmatprep.subr.bf16.mxu0 0
          %1172 = vmatpush1.bf16.msra.mxu0 0
          %1173 = vmatprep.subr.bf16.mxu0 0
          %1174 = vmatpush1.bf16.msra.mxu0 0
          %1175 = vmatprep.mubr.bf16.mxu0 0
          %1176 = vmatmul.mubr.bf16.gmra.mrb[0].mxu0 %v673
          %v1177 = vpop.f32.mrb[0].mxu0
          %v1178 = vadd.f32 %v592, %v1177
          %v1179 = vpop.f32.mrb[0].mxu0
          %v1180 = vpop.f32.mrb[0].mxu0
          %v1181 = vpop.f32.mrb[0].mxu0
          %1182 = vdwg.mxu0
          %v1187 = vunpack.c.l.b16 %v477
          %v1188 = vunpack.c.l.b16 %v478
          %v1189 = vunpack.c.l.b16 %v479
          %v1190 = vunpack.c.l.b16 %v480
          %v1191 = vpack.c.b16 %v1188, %v1187
          %v1192 = vpack.c.b16 %v1190, %v1189
          %1195 = vmatprep.subr.bf16.mxu0 0
          %1196 = vmatpush1.bf16.msra.mxu0 %v1191
          %1197 = vmatprep.subr.bf16.mxu0 0
          %1198 = vmatpush1.bf16.msra.mxu0 %v1192
          %1199 = vmatprep.subr.bf16.mxu0 0
          %1200 = vmatpush1.bf16.msra.mxu0 0
          %1201 = vmatprep.subr.bf16.mxu0 0
          %1202 = vmatpush1.bf16.msra.mxu0 0
          %1203 = vmatprep.subr.bf16.mxu0 0
          %1204 = vmatpush1.bf16.msra.mxu0 0
          %1205 = vmatprep.subr.bf16.mxu0 0
          %1206 = vmatpush1.bf16.msra.mxu0 0
          %1207 = vmatprep.subr.bf16.mxu0 0
          %1208 = vmatpush1.bf16.msra.mxu0 0
          %1209 = vmatprep.subr.bf16.mxu0 0
          %1210 = vmatpush1.bf16.msra.mxu0 0
          %1211 = vmatprep.subr.bf16.mxu0 0
          %1212 = vmatpush1.bf16.msra.mxu0 0
          %1213 = vmatprep.subr.bf16.mxu0 0
          %1214 = vmatpush1.bf16.msra.mxu0 0
          %1215 = vmatprep.subr.bf16.mxu0 0
          %1216 = vmatpush1.bf16.msra.mxu0 0
          %1217 = vmatprep.subr.bf16.mxu0 0
          %1218 = vmatpush1.bf16.msra.mxu0 0
          %1219 = vmatprep.subr.bf16.mxu0 0
          %1220 = vmatpush1.bf16.msra.mxu0 0
          %1221 = vmatprep.subr.bf16.mxu0 0
          %1222 = vmatpush1.bf16.msra.mxu0 0
          %1223 = vmatprep.subr.bf16.mxu0 0
          %1224 = vmatpush1.bf16.msra.mxu0 0
          %1225 = vmatprep.subr.bf16.mxu0 0
          %1226 = vmatpush1.bf16.msra.mxu0 0
          %1227 = vmatprep.mubr.bf16.mxu0 0
          %1228 = vmatmul.mubr.bf16.gmra.mrb[0].mxu0 %v673
          %v1229 = vpop.f32.mrb[0].mxu0
          %v1230 = vadd.f32 %v596, %v1229
          %v1231 = vpop.f32.mrb[0].mxu0
          %v1232 = vpop.f32.mrb[0].mxu0
          %v1233 = vpop.f32.mrb[0].mxu0
          %1234 = vdwg.mxu0
          %v1239 = vunpack.c.l.b16 %v481
          %v1240 = vunpack.c.l.b16 %v482
          %v1241 = vunpack.c.l.b16 %v483
          %v1242 = vunpack.c.l.b16 %v484
          %v1243 = vpack.c.b16 %v1240, %v1239
          %v1244 = vpack.c.b16 %v1242, %v1241
          %1247 = vmatprep.subr.bf16.mxu0 0
          %1248 = vmatpush1.bf16.msra.mxu0 %v1243
          %1249 = vmatprep.subr.bf16.mxu0 0
          %1250 = vmatpush1.bf16.msra.mxu0 %v1244
          %1251 = vmatprep.subr.bf16.mxu0 0
          %1252 = vmatpush1.bf16.msra.mxu0 0
          %1253 = vmatprep.subr.bf16.mxu0 0
          %1254 = vmatpush1.bf16.msra.mxu0 0
          %1255 = vmatprep.subr.bf16.mxu0 0
          %1256 = vmatpush1.bf16.msra.mxu0 0
          %1257 = vmatprep.subr.bf16.mxu0 0
          %1258 = vmatpush1.bf16.msra.mxu0 0
          %1259 = vmatprep.subr.bf16.mxu0 0
          %1260 = vmatpush1.bf16.msra.mxu0 0
          %1261 = vmatprep.subr.bf16.mxu0 0
          %1262 = vmatpush1.bf16.msra.mxu0 0
          %1263 = vmatprep.subr.bf16.mxu0 0
          %1264 = vmatpush1.bf16.msra.mxu0 0
          %1265 = vmatprep.subr.bf16.mxu0 0
          %1266 = vmatpush1.bf16.msra.mxu0 0
          %1267 = vmatprep.subr.bf16.mxu0 0
          %1268 = vmatpush1.bf16.msra.mxu0 0
          %1269 = vmatprep.subr.bf16.mxu0 0
          %1270 = vmatpush1.bf16.msra.mxu0 0
          %1271 = vmatprep.subr.bf16.mxu0 0
          %1272 = vmatpush1.bf16.msra.mxu0 0
          %1273 = vmatprep.subr.bf16.mxu0 0
          %1274 = vmatpush1.bf16.msra.mxu0 0
          %1275 = vmatprep.subr.bf16.mxu0 0
          %1276 = vmatpush1.bf16.msra.mxu0 0
          %1277 = vmatprep.subr.bf16.mxu0 0
          %1278 = vmatpush1.bf16.msra.mxu0 0
          %1279 = vmatprep.mubr.bf16.mxu0 0
          %1280 = vmatmul.mubr.bf16.gmra.mrb[0].mxu0 %v673
          %v1281 = vpop.f32.mrb[0].mxu0
          %v1282 = vadd.f32 %v600, %v1281
          %v1283 = vpop.f32.mrb[0].mxu0
          %v1284 = vpop.f32.mrb[0].mxu0
          %v1285 = vpop.f32.mrb[0].mxu0
          %1286 = vdwg.mxu0
          %v1287 = vpack.c.bf16 %v710, %v710
          %v1288 = vpack.c.bf16 %v762, %v762
          %v1289 = vpack.c.bf16 %v814, %v814
          %v1290 = vpack.c.bf16 %v866, %v866
          %v1291 = vpack.c.bf16 %v918, %v918
          %v1292 = vpack.c.bf16 %v970, %v970
          %v1293 = vpack.c.bf16 %v1022, %v1022
          %v1294 = vpack.c.bf16 %v1074, %v1074
          %v1295 = vpack.c.bf16 %v1126, %v1126
          %v1296 = vpack.c.bf16 %v1178, %v1178
          %v1297 = vpack.c.bf16 %v1230, %v1230
          %v1298 = vpack.c.bf16 %v1282, %v1282
          %vm1299 = vcmask 64512
          %v1301 = vsel %vm1299, %v1287, 0
          %v1304 = vsel %vm1299, %v1291, 0
          %1306 = vmatprep.subr.bf16.mxu0 0
          %1307 = vmatpush1.bf16.xpose.msra.mxu0 %v1304
          %1308 = vmatprep.subr.bf16.mxu0 0
          %1309 = vmatpush1.bf16.xpose.msra.mxu0 0
          %1310 = vmatprep.subr.bf16.mxu0 0
          %1311 = vmatpush1.bf16.xpose.msra.mxu0 0
          %1312 = vmatprep.subr.bf16.mxu0 0
          %1313 = vmatpush1.bf16.xpose.msra.mxu0 0
          %1314 = vmatprep.subr.bf16.mxu0 0
          %1315 = vmatpush1.bf16.xpose.msra.mxu0 0
          %1316 = vmatprep.subr.bf16.mxu0 0
          %1317 = vmatpush1.bf16.xpose.msra.mxu0 0
          %1318 = vmatprep.subr.bf16.mxu0 0
          %1319 = vmatpush1.bf16.xpose.msra.mxu0 0
          %1320 = vmatprep.subr.bf16.mxu0 0
          %1321 = vmatpush1.bf16.xpose.msra.mxu0 0
          %1322 = vmatprep.subr.bf16.mxu0 0
          %1323 = vmatpush1.bf16.xpose.msra.mxu0 0
          %1324 = vmatprep.subr.bf16.mxu0 0
          %1325 = vmatpush1.bf16.xpose.msra.mxu0 0
          %1326 = vmatprep.subr.bf16.mxu0 0
          %1327 = vmatpush1.bf16.xpose.msra.mxu0 0
          %1328 = vmatprep.subr.bf16.mxu0 0
          %1329 = vmatpush1.bf16.xpose.msra.mxu0 0
          %1330 = vmatprep.subr.bf16.mxu0 0
          %1331 = vmatpush1.bf16.xpose.msra.mxu0 0
          %1332 = vmatprep.subr.bf16.mxu0 0
          %1333 = vmatpush1.bf16.xpose.msra.mxu0 0
          %1334 = vmatprep.subr.bf16.mxu0 0
          %1335 = vmatpush1.bf16.xpose.msra.mxu0 0
          %1336 = vmatprep.subr.bf16.mxu0 0
          %1337 = vmatpush1.bf16.xpose.msra.mxu0 0
          %1338 = vmatprep.mubr.bf16.mxu0 0
          %1339 = vmatmul.mubr.bf16.gmra.mrb[0].mxu0 %v1301
          %v1340 = vpop.f32.mrb[0].mxu0
          %v1341 = vadd.f32 0.0, %v1340
          %v1342 = vpop.f32.mrb[0].mxu0
          %v1343 = vpop.f32.mrb[0].mxu0
          %v1344 = vpop.f32.mrb[0].mxu0
          %1345 = vdwg.mxu0
          %v1347 = vsel %vm1299, %v1288, 0
          %v1350 = vsel %vm1299, %v1292, 0
          %1352 = vmatprep.subr.bf16.mxu0 0
          %1353 = vmatpush1.bf16.xpose.msra.mxu0 %v1350
          %1354 = vmatprep.subr.bf16.mxu0 0
          %1355 = vmatpush1.bf16.xpose.msra.mxu0 0
          %1356 = vmatprep.subr.bf16.mxu0 0
          %1357 = vmatpush1.bf16.xpose.msra.mxu0 0
          %1358 = vmatprep.subr.bf16.mxu0 0
          %1359 = vmatpush1.bf16.xpose.msra.mxu0 0
          %1360 = vmatprep.subr.bf16.mxu0 0
          %1361 = vmatpush1.bf16.xpose.msra.mxu0 0
          %1362 = vmatprep.subr.bf16.mxu0 0
          %1363 = vmatpush1.bf16.xpose.msra.mxu0 0
          %1364 = vmatprep.subr.bf16.mxu0 0
          %1365 = vmatpush1.bf16.xpose.msra.mxu0 0
          %1366 = vmatprep.subr.bf16.mxu0 0
          %1367 = vmatpush1.bf16.xpose.msra.mxu0 0
          %1368 = vmatprep.subr.bf16.mxu0 0
          %1369 = vmatpush1.bf16.xpose.msra.mxu0 0
          %1370 = vmatprep.subr.bf16.mxu0 0
          %1371 = vmatpush1.bf16.xpose.msra.mxu0 0
          %1372 = vmatprep.subr.bf16.mxu0 0
          %1373 = vmatpush1.bf16.xpose.msra.mxu0 0
          %1374 = vmatprep.subr.bf16.mxu0 0
          %1375 = vmatpush1.bf16.xpose.msra.mxu0 0
          %1376 = vmatprep.subr.bf16.mxu0 0
          %1377 = vmatpush1.bf16.xpose.msra.mxu0 0
          %1378 = vmatprep.subr.bf16.mxu0 0
          %1379 = vmatpush1.bf16.xpose.msra.mxu0 0
          %1380 = vmatprep.subr.bf16.mxu0 0
          %1381 = vmatpush1.bf16.xpose.msra.mxu0 0
          %1382 = vmatprep.subr.bf16.mxu0 0
          %1383 = vmatpush1.bf16.xpose.msra.mxu0 0
          %1384 = vmatprep.mubr.bf16.mxu0 0
          %1385 = vmatmul.mubr.bf16.gmra.mrb[0].mxu0 %v1347
          %v1386 = vpop.f32.mrb[0].mxu0
          %v1387 = vadd.f32 0.0, %v1386
          %v1388 = vpop.f32.mrb[0].mxu0
          %v1389 = vpop.f32.mrb[0].mxu0
          %v1390 = vpop.f32.mrb[0].mxu0
          %1391 = vdwg.mxu0
          %v1393 = vsel %vm1299, %v1289, 0
          %v1396 = vsel %vm1299, %v1293, 0
          %1398 = vmatprep.subr.bf16.mxu0 0
          %1399 = vmatpush1.bf16.xpose.msra.mxu0 %v1396
          %1400 = vmatprep.subr.bf16.mxu0 0
          %1401 = vmatpush1.bf16.xpose.msra.mxu0 0
          %1402 = vmatprep.subr.bf16.mxu0 0
          %1403 = vmatpush1.bf16.xpose.msra.mxu0 0
          %1404 = vmatprep.subr.bf16.mxu0 0
          %1405 = vmatpush1.bf16.xpose.msra.mxu0 0
          %1406 = vmatprep.subr.bf16.mxu0 0
          %1407 = vmatpush1.bf16.xpose.msra.mxu0 0
          %1408 = vmatprep.subr.bf16.mxu0 0
          %1409 = vmatpush1.bf16.xpose.msra.mxu0 0
          %1410 = vmatprep.subr.bf16.mxu0 0
          %1411 = vmatpush1.bf16.xpose.msra.mxu0 0
          %1412 = vmatprep.subr.bf16.mxu0 0
          %1413 = vmatpush1.bf16.xpose.msra.mxu0 0
          %1414 = vmatprep.subr.bf16.mxu0 0
          %1415 = vmatpush1.bf16.xpose.msra.mxu0 0
          %1416 = vmatprep.subr.bf16.mxu0 0
          %1417 = vmatpush1.bf16.xpose.msra.mxu0 0
          %1418 = vmatprep.subr.bf16.mxu0 0
          %1419 = vmatpush1.bf16.xpose.msra.mxu0 0
          %1420 = vmatprep.subr.bf16.mxu0 0
          %1421 = vmatpush1.bf16.xpose.msra.mxu0 0
          %1422 = vmatprep.subr.bf16.mxu0 0
          %1423 = vmatpush1.bf16.xpose.msra.mxu0 0
          %1424 = vmatprep.subr.bf16.mxu0 0
          %1425 = vmatpush1.bf16.xpose.msra.mxu0 0
          %1426 = vmatprep.subr.bf16.mxu0 0
          %1427 = vmatpush1.bf16.xpose.msra.mxu0 0
          %1428 = vmatprep.subr.bf16.mxu0 0
          %1429 = vmatpush1.bf16.xpose.msra.mxu0 0
          %1430 = vmatprep.mubr.bf16.mxu0 0
          %1431 = vmatmul.mubr.bf16.gmra.mrb[0].mxu0 %v1393
          %v1432 = vpop.f32.mrb[0].mxu0
          %v1433 = vadd.f32 0.0, %v1432
          %v1434 = vpop.f32.mrb[0].mxu0
          %v1435 = vpop.f32.mrb[0].mxu0
          %v1436 = vpop.f32.mrb[0].mxu0
          %1437 = vdwg.mxu0
          %v1439 = vsel %vm1299, %v1290, 0
          %v1442 = vsel %vm1299, %v1294, 0
          %1444 = vmatprep.subr.bf16.mxu0 0
          %1445 = vmatpush1.bf16.xpose.msra.mxu0 %v1442
          %1446 = vmatprep.subr.bf16.mxu0 0
          %1447 = vmatpush1.bf16.xpose.msra.mxu0 0
          %1448 = vmatprep.subr.bf16.mxu0 0
          %1449 = vmatpush1.bf16.xpose.msra.mxu0 0
          %1450 = vmatprep.subr.bf16.mxu0 0
          %1451 = vmatpush1.bf16.xpose.msra.mxu0 0
          %1452 = vmatprep.subr.bf16.mxu0 0
          %1453 = vmatpush1.bf16.xpose.msra.mxu0 0
          %1454 = vmatprep.subr.bf16.mxu0 0
          %1455 = vmatpush1.bf16.xpose.msra.mxu0 0
          %1456 = vmatprep.subr.bf16.mxu0 0
          %1457 = vmatpush1.bf16.xpose.msra.mxu0 0
          %1458 = vmatprep.subr.bf16.mxu0 0
          %1459 = vmatpush1.bf16.xpose.msra.mxu0 0
          %1460 = vmatprep.subr.bf16.mxu0 0
          %1461 = vmatpush1.bf16.xpose.msra.mxu0 0
          %1462 = vmatprep.subr.bf16.mxu0 0
          %1463 = vmatpush1.bf16.xpose.msra.mxu0 0
          %1464 = vmatprep.subr.bf16.mxu0 0
          %1465 = vmatpush1.bf16.xpose.msra.mxu0 0
          %1466 = vmatprep.subr.bf16.mxu0 0
          %1467 = vmatpush1.bf16.xpose.msra.mxu0 0
          %1468 = vmatprep.subr.bf16.mxu0 0
          %1469 = vmatpush1.bf16.xpose.msra.mxu0 0
          %1470 = vmatprep.subr.bf16.mxu0 0
          %1471 = vmatpush1.bf16.xpose.msra.mxu0 0
          %1472 = vmatprep.subr.bf16.mxu0 0
          %1473 = vmatpush1.bf16.xpose.msra.mxu0 0
          %1474 = vmatprep.subr.bf16.mxu0 0
          %1475 = vmatpush1.bf16.xpose.msra.mxu0 0
          %1476 = vmatprep.mubr.bf16.mxu0 0
          %1477 = vmatmul.mubr.bf16.gmra.mrb[0].mxu0 %v1439
          %v1478 = vpop.f32.mrb[0].mxu0
          %v1479 = vadd.f32 0.0, %v1478
          %v1480 = vpop.f32.mrb[0].mxu0
          %v1481 = vpop.f32.mrb[0].mxu0
          %v1482 = vpop.f32.mrb[0].mxu0
          %1483 = vdwg.mxu0
          %v1484 = vsel %vm1299, %v1341, -inf
          %1485 = vmax.xlane.f32.xlu0 %v1484
          %v1486 = vpop.xlane.xlu0 %1485
          %v1487 = vsel %vm1299, %v1387, -inf
          %1488 = vmax.xlane.f32.xlu0 %v1487
          %v1489 = vpop.xlane.xlu0 %1488
          %v1490 = vsel %vm1299, %v1433, -inf
          %1491 = vmax.xlane.f32.xlu0 %v1490
          %v1492 = vpop.xlane.xlu0 %1491
          %v1493 = vsel %vm1299, %v1479, -inf
          %1494 = vmax.xlane.f32.xlu0 %v1493
          %v1495 = vpop.xlane.xlu0 %1494
          %v1496 = vsub.f32 %v1341, %v1486
          %v1497 = vsub.f32 %v1387, %v1489
          %v1498 = vsub.f32 %v1433, %v1492
          %v1499 = vsub.f32 %v1479, %v1495
          %v1500 = vmul.f32 %v1496, 1.442695
          %v1501 = vpow.pop %v1500
          %v1502 = vmul.f32 %v1497, 1.442695
          %v1503 = vpow.pop %v1502
          %v1504 = vmul.f32 %v1498, 1.442695
          %v1505 = vpow.pop %v1504
          %v1506 = vmul.f32 %v1499, 1.442695
          %v1507 = vpow.pop %v1506
          %v1508 = vsel %vm1299, %v1501, 0.0
          %1509 = vadd.xlane.f32.xlu0 %v1508
          %v1510 = vpop.xlane.xlu0 %1509
          %v1511 = vsel %vm1299, %v1503, 0.0
          %1512 = vadd.xlane.f32.xlu0 %v1511
          %v1513 = vpop.xlane.xlu0 %1512
          %v1514 = vsel %vm1299, %v1505, 0.0
          %1515 = vadd.xlane.f32.xlu0 %v1514
          %v1516 = vpop.xlane.xlu0 %1515
          %v1517 = vsel %vm1299, %v1507, 0.0
          %1518 = vadd.xlane.f32.xlu0 %v1517
          %v1519 = vpop.xlane.xlu0 %1518
          %v1520 = vrcp.pop %v1510
          %v1521 = vrcp.pop %v1513
          %v1522 = vrcp.pop %v1516
          %v1523 = vrcp.pop %v1519
          %v1524 = vmul.f32 %v1501, %v1520
          %v1525 = vmul.f32 %v1503, %v1521
          %v1526 = vmul.f32 %v1505, %v1522
          %v1527 = vmul.f32 %v1507, %v1523
          %v1528 = vpack.c.bf16 %v1524, %v1524
          %v1529 = vpack.c.bf16 %v1525, %v1525
          %v1530 = vpack.c.bf16 %v1526, %v1526
          %v1531 = vpack.c.bf16 %v1527, %v1527
          %v1533 = vsel %vm1299, %v1528, 0
          %vm1535 = vcmask 1043456
          %v1537 = vsel %vm1535, %v1295, 0
          %1539 = vmatprep.subr.bf16.mxu0 0
          %1540 = vmatpush1.bf16.msra.mxu0 %v1537
          %1541 = vmatprep.subr.bf16.mxu0 0
          %1542 = vmatpush1.bf16.msra.mxu0 0
          %1543 = vmatprep.subr.bf16.mxu0 0
          %1544 = vmatpush1.bf16.msra.mxu0 0
          %1545 = vmatprep.subr.bf16.mxu0 0
          %1546 = vmatpush1.bf16.msra.mxu0 0
          %1547 = vmatprep.subr.bf16.mxu0 0
          %1548 = vmatpush1.bf16.msra.mxu0 0
          %1549 = vmatprep.subr.bf16.mxu0 0
          %1550 = vmatpush1.bf16.msra.mxu0 0
          %1551 = vmatprep.subr.bf16.mxu0 0
          %1552 = vmatpush1.bf16.msra.mxu0 0
          %1553 = vmatprep.subr.bf16.mxu0 0
          %1554 = vmatpush1.bf16.msra.mxu0 0
          %1555 = vmatprep.subr.bf16.mxu0 0
          %1556 = vmatpush1.bf16.msra.mxu0 0
          %1557 = vmatprep.subr.bf16.mxu0 0
          %1558 = vmatpush1.bf16.msra.mxu0 0
          %1559 = vmatprep.subr.bf16.mxu0 0
          %1560 = vmatpush1.bf16.msra.mxu0 0
          %1561 = vmatprep.subr.bf16.mxu0 0
          %1562 = vmatpush1.bf16.msra.mxu0 0
          %1563 = vmatprep.subr.bf16.mxu0 0
          %1564 = vmatpush1.bf16.msra.mxu0 0
          %1565 = vmatprep.subr.bf16.mxu0 0
          %1566 = vmatpush1.bf16.msra.mxu0 0
          %1567 = vmatprep.subr.bf16.mxu0 0
          %1568 = vmatpush1.bf16.msra.mxu0 0
          %1569 = vmatprep.subr.bf16.mxu0 0
          %1570 = vmatpush1.bf16.msra.mxu0 0
          %1571 = vmatprep.mubr.bf16.mxu0 0
          %1572 = vmatmul.mubr.bf16.gmra.mrb[0].mxu0 %v1533
          %v1573 = vpop.f32.mrb[0].mxu0
          %v1574 = vadd.f32 0.0, %v1573
          %v1575 = vpop.f32.mrb[0].mxu0
          %v1576 = vpop.f32.mrb[0].mxu0
          %v1577 = vpop.f32.mrb[0].mxu0
          %1578 = vdwg.mxu0
          %v1580 = vsel %vm1299, %v1529, 0
          %v1583 = vsel %vm1535, %v1296, 0
          %1585 = vmatprep.subr.bf16.mxu0 0
          %1586 = vmatpush1.bf16.msra.mxu0 %v1583
          %1587 = vmatprep.subr.bf16.mxu0 0
          %1588 = vmatpush1.bf16.msra.mxu0 0
          %1589 = vmatprep.subr.bf16.mxu0 0
          %1590 = vmatpush1.bf16.msra.mxu0 0
          %1591 = vmatprep.subr.bf16.mxu0 0
          %1592 = vmatpush1.bf16.msra.mxu0 0
          %1593 = vmatprep.subr.bf16.mxu0 0
          %1594 = vmatpush1.bf16.msra.mxu0 0
          %1595 = vmatprep.subr.bf16.mxu0 0
          %1596 = vmatpush1.bf16.msra.mxu0 0
          %1597 = vmatprep.subr.bf16.mxu0 0
          %1598 = vmatpush1.bf16.msra.mxu0 0
          %1599 = vmatprep.subr.bf16.mxu0 0
          %1600 = vmatpush1.bf16.msra.mxu0 0
          %1601 = vmatprep.subr.bf16.mxu0 0
          %1602 = vmatpush1.bf16.msra.mxu0 0
          %1603 = vmatprep.subr.bf16.mxu0 0
          %1604 = vmatpush1.bf16.msra.mxu0 0
          %1605 = vmatprep.subr.bf16.mxu0 0
          %1606 = vmatpush1.bf16.msra.mxu0 0
          %1607 = vmatprep.subr.bf16.mxu0 0
          %1608 = vmatpush1.bf16.msra.mxu0 0
          %1609 = vmatprep.subr.bf16.mxu0 0
          %1610 = vmatpush1.bf16.msra.mxu0 0
          %1611 = vmatprep.subr.bf16.mxu0 0
          %1612 = vmatpush1.bf16.msra.mxu0 0
          %1613 = vmatprep.subr.bf16.mxu0 0
          %1614 = vmatpush1.bf16.msra.mxu0 0
          %1615 = vmatprep.subr.bf16.mxu0 0
          %1616 = vmatpush1.bf16.msra.mxu0 0
          %1617 = vmatprep.mubr.bf16.mxu0 0
          %1618 = vmatmul.mubr.bf16.gmra.mrb[0].mxu0 %v1580
          %v1619 = vpop.f32.mrb[0].mxu0
          %v1620 = vadd.f32 0.0, %v1619
          %v1621 = vpop.f32.mrb[0].mxu0
          %v1622 = vpop.f32.mrb[0].mxu0
          %v1623 = vpop.f32.mrb[0].mxu0
          %1624 = vdwg.mxu0
          %v1626 = vsel %vm1299, %v1530, 0
          %v1629 = vsel %vm1535, %v1297, 0
          %1631 = vmatprep.subr.bf16.mxu0 0
          %1632 = vmatpush1.bf16.msra.mxu0 %v1629
          %1633 = vmatprep.subr.bf16.mxu0 0
          %1634 = vmatpush1.bf16.msra.mxu0 0
          %1635 = vmatprep.subr.bf16.mxu0 0
          %1636 = vmatpush1.bf16.msra.mxu0 0
          %1637 = vmatprep.subr.bf16.mxu0 0
          %1638 = vmatpush1.bf16.msra.mxu0 0
          %1639 = vmatprep.subr.bf16.mxu0 0
          %1640 = vmatpush1.bf16.msra.mxu0 0
          %1641 = vmatprep.subr.bf16.mxu0 0
          %1642 = vmatpush1.bf16.msra.mxu0 0
          %1643 = vmatprep.subr.bf16.mxu0 0
          %1644 = vmatpush1.bf16.msra.mxu0 0
          %1645 = vmatprep.subr.bf16.mxu0 0
          %1646 = vmatpush1.bf16.msra.mxu0 0
          %1647 = vmatprep.subr.bf16.mxu0 0
          %1648 = vmatpush1.bf16.msra.mxu0 0
          %1649 = vmatprep.subr.bf16.mxu0 0
          %1650 = vmatpush1.bf16.msra.mxu0 0
          %1651 = vmatprep.subr.bf16.mxu0 0
          %1652 = vmatpush1.bf16.msra.mxu0 0
          %1653 = vmatprep.subr.bf16.mxu0 0
          %1654 = vmatpush1.bf16.msra.mxu0 0
          %1655 = vmatprep.subr.bf16.mxu0 0
          %1656 = vmatpush1.bf16.msra.mxu0 0
          %1657 = vmatprep.subr.bf16.mxu0 0
          %1658 = vmatpush1.bf16.msra.mxu0 0
          %1659 = vmatprep.subr.bf16.mxu0 0
          %1660 = vmatpush1.bf16.msra.mxu0 0
          %1661 = vmatprep.subr.bf16.mxu0 0
          %1662 = vmatpush1.bf16.msra.mxu0 0
          %1663 = vmatprep.mubr.bf16.mxu0 0
          %1664 = vmatmul.mubr.bf16.gmra.mrb[0].mxu0 %v1626
          %v1665 = vpop.f32.mrb[0].mxu0
          %v1666 = vadd.f32 0.0, %v1665
          %v1667 = vpop.f32.mrb[0].mxu0
          %v1668 = vpop.f32.mrb[0].mxu0
          %v1669 = vpop.f32.mrb[0].mxu0
          %1670 = vdwg.mxu0
          %v1672 = vsel %vm1299, %v1531, 0
          %v1675 = vsel %vm1535, %v1298, 0
          %1677 = vmatprep.subr.bf16.mxu0 0
          %1678 = vmatpush1.bf16.msra.mxu0 %v1675
          %1679 = vmatprep.subr.bf16.mxu0 0
          %1680 = vmatpush1.bf16.msra.mxu0 0
          %1681 = vmatprep.subr.bf16.mxu0 0
          %1682 = vmatpush1.bf16.msra.mxu0 0
          %1683 = vmatprep.subr.bf16.mxu0 0
          %1684 = vmatpush1.bf16.msra.mxu0 0
          %1685 = vmatprep.subr.bf16.mxu0 0
          %1686 = vmatpush1.bf16.msra.mxu0 0
          %1687 = vmatprep.subr.bf16.mxu0 0
          %1688 = vmatpush1.bf16.msra.mxu0 0
          %1689 = vmatprep.subr.bf16.mxu0 0
          %1690 = vmatpush1.bf16.msra.mxu0 0
          %1691 = vmatprep.subr.bf16.mxu0 0
          %1692 = vmatpush1.bf16.msra.mxu0 0
          %1693 = vmatprep.subr.bf16.mxu0 0
          %1694 = vmatpush1.bf16.msra.mxu0 0
          %1695 = vmatprep.subr.bf16.mxu0 0
          %1696 = vmatpush1.bf16.msra.mxu0 0
          %1697 = vmatprep.subr.bf16.mxu0 0
          %1698 = vmatpush1.bf16.msra.mxu0 0
          %1699 = vmatprep.subr.bf16.mxu0 0
          %1700 = vmatpush1.bf16.msra.mxu0 0
          %1701 = vmatprep.subr.bf16.mxu0 0
          %1702 = vmatpush1.bf16.msra.mxu0 0
          %1703 = vmatprep.subr.bf16.mxu0 0
          %1704 = vmatpush1.bf16.msra.mxu0 0
          %1705 = vmatprep.subr.bf16.mxu0 0
          %1706 = vmatpush1.bf16.msra.mxu0 0
          %1707 = vmatprep.subr.bf16.mxu0 0
          %1708 = vmatpush1.bf16.msra.mxu0 0
          %1709 = vmatprep.mubr.bf16.mxu0 0
          %1710 = vmatmul.mubr.bf16.gmra.mrb[0].mxu0 %v1672
          %v1711 = vpop.f32.mrb[0].mxu0
          %v1712 = vadd.f32 0.0, %v1711
          %v1713 = vpop.f32.mrb[0].mxu0
          %v1714 = vpop.f32.mrb[0].mxu0
          %v1715 = vpop.f32.mrb[0].mxu0
          %1716 = vdwg.mxu0
          %v1717 = vpack.c.bf16 %v1574, %v1574
          %v1718 = vpack.c.bf16 %v1620, %v1620
          %v1719 = vpack.c.bf16 %v1666, %v1666
          %v1720 = vpack.c.bf16 %v1712, %v1712
          %v1722 = vsel %vm1299, %v1717, 0
          %v1725 = vsel %vm1535, %v485, 0
          %1727 = vmatprep.subr.bf16.mxu0 0
          %1728 = vmatpush1.bf16.msra.mxu0 %v1725
          %1729 = vmatprep.subr.bf16.mxu0 0
          %1730 = vmatpush1.bf16.msra.mxu0 0
          %1731 = vmatprep.subr.bf16.mxu0 0
          %1732 = vmatpush1.bf16.msra.mxu0 0
          %1733 = vmatprep.subr.bf16.mxu0 0
          %1734 = vmatpush1.bf16.msra.mxu0 0
          %1735 = vmatprep.subr.bf16.mxu0 0
          %1736 = vmatpush1.bf16.msra.mxu0 0
          %1737 = vmatprep.subr.bf16.mxu0 0
          %1738 = vmatpush1.bf16.msra.mxu0 0
          %1739 = vmatprep.subr.bf16.mxu0 0
          %1740 = vmatpush1.bf16.msra.mxu0 0
          %1741 = vmatprep.subr.bf16.mxu0 0
          %1742 = vmatpush1.bf16.msra.mxu0 0
          %1743 = vmatprep.subr.bf16.mxu0 0
          %1744 = vmatpush1.bf16.msra.mxu0 0
          %1745 = vmatprep.subr.bf16.mxu0 0
          %1746 = vmatpush1.bf16.msra.mxu0 0
          %1747 = vmatprep.subr.bf16.mxu0 0
          %1748 = vmatpush1.bf16.msra.mxu0 0
          %1749 = vmatprep.subr.bf16.mxu0 0
          %1750 = vmatpush1.bf16.msra.mxu0 0
          %1751 = vmatprep.subr.bf16.mxu0 0
          %1752 = vmatpush1.bf16.msra.mxu0 0
          %1753 = vmatprep.subr.bf16.mxu0 0
          %1754 = vmatpush1.bf16.msra.mxu0 0
          %1755 = vmatprep.subr.bf16.mxu0 0
          %1756 = vmatpush1.bf16.msra.mxu0 0
          %1757 = vmatprep.subr.bf16.mxu0 0
          %1758 = vmatpush1.bf16.msra.mxu0 0
          %1759 = vmatprep.mubr.bf16.mxu0 0
          %1760 = vmatmul.mubr.bf16.gmra.mrb[0].mxu0 %v1722
          %v1761 = vpop.f32.mrb[0].mxu0
          %v1762 = vadd.f32 0.0, %v1761
          %v1763 = vpop.f32.mrb[0].mxu0
          %v1764 = vpop.f32.mrb[0].mxu0
          %v1765 = vpop.f32.mrb[0].mxu0
          %1766 = vdwg.mxu0
          %v1768 = vsel %vm1299, %v1718, 0
          %v1771 = vsel %vm1535, %v486, 0
          %1773 = vmatprep.subr.bf16.mxu0 0
          %1774 = vmatpush1.bf16.msra.mxu0 %v1771
          %1775 = vmatprep.subr.bf16.mxu0 0
          %1776 = vmatpush1.bf16.msra.mxu0 0
          %1777 = vmatprep.subr.bf16.mxu0 0
          %1778 = vmatpush1.bf16.msra.mxu0 0
          %1779 = vmatprep.subr.bf16.mxu0 0
          %1780 = vmatpush1.bf16.msra.mxu0 0
          %1781 = vmatprep.subr.bf16.mxu0 0
          %1782 = vmatpush1.bf16.msra.mxu0 0
          %1783 = vmatprep.subr.bf16.mxu0 0
          %1784 = vmatpush1.bf16.msra.mxu0 0
          %1785 = vmatprep.subr.bf16.mxu0 0
          %1786 = vmatpush1.bf16.msra.mxu0 0
          %1787 = vmatprep.subr.bf16.mxu0 0
          %1788 = vmatpush1.bf16.msra.mxu0 0
          %1789 = vmatprep.subr.bf16.mxu0 0
          %1790 = vmatpush1.bf16.msra.mxu0 0
          %1791 = vmatprep.subr.bf16.mxu0 0
          %1792 = vmatpush1.bf16.msra.mxu0 0
          %1793 = vmatprep.subr.bf16.mxu0 0
          %1794 = vmatpush1.bf16.msra.mxu0 0
          %1795 = vmatprep.subr.bf16.mxu0 0
          %1796 = vmatpush1.bf16.msra.mxu0 0
          %1797 = vmatprep.subr.bf16.mxu0 0
          %1798 = vmatpush1.bf16.msra.mxu0 0
          %1799 = vmatprep.subr.bf16.mxu0 0
          %1800 = vmatpush1.bf16.msra.mxu0 0
          %1801 = vmatprep.subr.bf16.mxu0 0
          %1802 = vmatpush1.bf16.msra.mxu0 0
          %1803 = vmatprep.subr.bf16.mxu0 0
          %1804 = vmatpush1.bf16.msra.mxu0 0
          %1805 = vmatprep.mubr.bf16.mxu0 0
          %1806 = vmatmul.mubr.bf16.gmra.mrb[0].mxu0 %v1768
          %v1807 = vpop.f32.mrb[0].mxu0
          %v1808 = vadd.f32 0.0, %v1807
          %v1809 = vpop.f32.mrb[0].mxu0
          %v1810 = vpop.f32.mrb[0].mxu0
          %v1811 = vpop.f32.mrb[0].mxu0
          %1812 = vdwg.mxu0
          %v1814 = vsel %vm1299, %v1719, 0
          %v1817 = vsel %vm1535, %v487, 0
          %1819 = vmatprep.subr.bf16.mxu0 0
          %1820 = vmatpush1.bf16.msra.mxu0 %v1817
          %1821 = vmatprep.subr.bf16.mxu0 0
          %1822 = vmatpush1.bf16.msra.mxu0 0
          %1823 = vmatprep.subr.bf16.mxu0 0
          %1824 = vmatpush1.bf16.msra.mxu0 0
          %1825 = vmatprep.subr.bf16.mxu0 0
          %1826 = vmatpush1.bf16.msra.mxu0 0
          %1827 = vmatprep.subr.bf16.mxu0 0
          %1828 = vmatpush1.bf16.msra.mxu0 0
          %1829 = vmatprep.subr.bf16.mxu0 0
          %1830 = vmatpush1.bf16.msra.mxu0 0
          %1831 = vmatprep.subr.bf16.mxu0 0
          %1832 = vmatpush1.bf16.msra.mxu0 0
          %1833 = vmatprep.subr.bf16.mxu0 0
          %1834 = vmatpush1.bf16.msra.mxu0 0
          %1835 = vmatprep.subr.bf16.mxu0 0
          %1836 = vmatpush1.bf16.msra.mxu0 0
          %1837 = vmatprep.subr.bf16.mxu0 0
          %1838 = vmatpush1.bf16.msra.mxu0 0
          %1839 = vmatprep.subr.bf16.mxu0 0
          %1840 = vmatpush1.bf16.msra.mxu0 0
          %1841 = vmatprep.subr.bf16.mxu0 0
          %1842 = vmatpush1.bf16.msra.mxu0 0
          %1843 = vmatprep.subr.bf16.mxu0 0
          %1844 = vmatpush1.bf16.msra.mxu0 0
          %1845 = vmatprep.subr.bf16.mxu0 0
          %1846 = vmatpush1.bf16.msra.mxu0 0
          %1847 = vmatprep.subr.bf16.mxu0 0
          %1848 = vmatpush1.bf16.msra.mxu0 0
          %1849 = vmatprep.subr.bf16.mxu0 0
          %1850 = vmatpush1.bf16.msra.mxu0 0
          %1851 = vmatprep.mubr.bf16.mxu0 0
          %1852 = vmatmul.mubr.bf16.gmra.mrb[0].mxu0 %v1814
          %v1853 = vpop.f32.mrb[0].mxu0
          %v1854 = vadd.f32 0.0, %v1853
          %v1855 = vpop.f32.mrb[0].mxu0
          %v1856 = vpop.f32.mrb[0].mxu0
          %v1857 = vpop.f32.mrb[0].mxu0
          %1858 = vdwg.mxu0
          %v1860 = vsel %vm1299, %v1720, 0
          %v1863 = vsel %vm1535, %v488, 0
          %1865 = vmatprep.subr.bf16.mxu0 0
          %1866 = vmatpush1.bf16.msra.mxu0 %v1863
          %1867 = vmatprep.subr.bf16.mxu0 0
          %1868 = vmatpush1.bf16.msra.mxu0 0
          %1869 = vmatprep.subr.bf16.mxu0 0
          %1870 = vmatpush1.bf16.msra.mxu0 0
          %1871 = vmatprep.subr.bf16.mxu0 0
          %1872 = vmatpush1.bf16.msra.mxu0 0
          %1873 = vmatprep.subr.bf16.mxu0 0
          %1874 = vmatpush1.bf16.msra.mxu0 0
          %1875 = vmatprep.subr.bf16.mxu0 0
          %1876 = vmatpush1.bf16.msra.mxu0 0
          %1877 = vmatprep.subr.bf16.mxu0 0
          %1878 = vmatpush1.bf16.msra.mxu0 0
          %1879 = vmatprep.subr.bf16.mxu0 0
          %1880 = vmatpush1.bf16.msra.mxu0 0
          %1881 = vmatprep.subr.bf16.mxu0 0
          %1882 = vmatpush1.bf16.msra.mxu0 0
          %1883 = vmatprep.subr.bf16.mxu0 0
          %1884 = vmatpush1.bf16.msra.mxu0 0
          %1885 = vmatprep.subr.bf16.mxu0 0
          %1886 = vmatpush1.bf16.msra.mxu0 0
          %1887 = vmatprep.subr.bf16.mxu0 0
          %1888 = vmatpush1.bf16.msra.mxu0 0
          %1889 = vmatprep.subr.bf16.mxu0 0
          %1890 = vmatpush1.bf16.msra.mxu0 0
          %1891 = vmatprep.subr.bf16.mxu0 0
          %1892 = vmatpush1.bf16.msra.mxu0 0
          %1893 = vmatprep.subr.bf16.mxu0 0
          %1894 = vmatpush1.bf16.msra.mxu0 0
          %1895 = vmatprep.subr.bf16.mxu0 0
          %1896 = vmatpush1.bf16.msra.mxu0 0
          %1897 = vmatprep.mubr.bf16.mxu0 0
          %1898 = vmatmul.mubr.bf16.gmra.mrb[0].mxu0 %v1860
          %v1899 = vpop.f32.mrb[0].mxu0
          %v1900 = vadd.f32 0.0, %v1899
          %v1901 = vpop.f32.mrb[0].mxu0
          %v1902 = vpop.f32.mrb[0].mxu0
          %v1903 = vpop.f32.mrb[0].mxu0
          %1904 = vdwg.mxu0
          %v1905 = vsel %vm642, %v1762, 0.0
          %v1906 = vsel %vm642, %v1808, 0.0
          %v1907 = vadd.f32 %v1905, %v1906
          %v1908 = vsel %vm642, %v1854, 0.0
          %v1909 = vadd.f32 %v1907, %v1908
          %v1910 = vsel %vm642, %v1900, 0.0
          %v1911 = vadd.f32 %v1909, %v1910
          %v1912 = vadd.f32 %v1911, %v618
          %v1913 = vadd.f32 %v1912, %v641
          %v1914 = vsel %vm642, %v1913, 0.0
          %1915 = vadd.xlane.f32.xlu0 %v1914
          %v1916 = vpop.xlane.xlu0 %1915
          %v1917 = vmul.f32 %v1916, %v646
          %v1918 = vsub.f32 %v1913, %v1917
          %v1919 = vmul.f32 %v1918, %v1918
          %v1920 = vsel %vm642, %v1919, 0.0
          %1921 = vadd.xlane.f32.xlu0 %v1920
          %v1922 = vpop.xlane.xlu0 %1921
          %v1923 = vmul.f32 %v1922, %v646
          %v1924 = vadd.f32 %v1923, 1e-05
          %v1925 = vrsqrt.pop %v1924
          %v1926 = vmul.f32 %v1918, %v1925
          %v1927 = vmul.f32 %v1926, %v520
          %v1928 = vadd.f32 %v1927, %v527
          %v1929 = vpack.c.bf16 %v1928, %v1928
          %v1934 = vunpack.c.l.b16 %v489
          %v1935 = vunpack.c.l.b16 %v490
          %v1936 = vunpack.c.l.b16 %v491
          %v1937 = vunpack.c.l.b16 %v492
          %v1938 = vpack.c.b16 %v1935, %v1934
          %v1939 = vpack.c.b16 %v1937, %v1936
          %v1943 = vsel %vm642, %v1929, 0
          %1945 = vmatprep.subr.bf16.mxu0 0
          %1946 = vmatpush1.bf16.msra.mxu0 %v1938
          %1947 = vmatprep.subr.bf16.mxu0 0
          %1948 = vmatpush1.bf16.msra.mxu0 %v1939
          %1949 = vmatprep.subr.bf16.mxu0 0
          %1950 = vmatpush1.bf16.msra.mxu0 0
          %1951 = vmatprep.subr.bf16.mxu0 0
          %1952 = vmatpush1.bf16.msra.mxu0 0
          %1953 = vmatprep.subr.bf16.mxu0 0
          %1954 = vmatpush1.bf16.msra.mxu0 0
          %1955 = vmatprep.subr.bf16.mxu0 0
          %1956 = vmatpush1.bf16.msra.mxu0 0
          %1957 = vmatprep.subr.bf16.mxu0 0
          %1958 = vmatpush1.bf16.msra.mxu0 0
          %1959 = vmatprep.subr.bf16.mxu0 0
          %1960 = vmatpush1.bf16.msra.mxu0 0
          %1961 = vmatprep.subr.bf16.mxu0 0
          %1962 = vmatpush1.bf16.msra.mxu0 0
          %1963 = vmatprep.subr.bf16.mxu0 0
          %1964 = vmatpush1.bf16.msra.mxu0 0
          %1965 = vmatprep.subr.bf16.mxu0 0
          %1966 = vmatpush1.bf16.msra.mxu0 0
          %1967 = vmatprep.subr.bf16.mxu0 0
          %1968 = vmatpush1.bf16.msra.mxu0 0
          %1969 = vmatprep.subr.bf16.mxu0 0
          %1970 = vmatpush1.bf16.msra.mxu0 0
          %1971 = vmatprep.subr.bf16.mxu0 0
          %1972 = vmatpush1.bf16.msra.mxu0 0
          %1973 = vmatprep.subr.bf16.mxu0 0
          %1974 = vmatpush1.bf16.msra.mxu0 0
          %1975 = vmatprep.subr.bf16.mxu0 0
          %1976 = vmatpush1.bf16.msra.mxu0 0
          %1977 = vmatprep.mubr.bf16.mxu0 0
          %1978 = vmatmul.mubr.bf16.gmra.mrb[0].mxu0 %v1943
          %v1979 = vpop.f32.mrb[0].mxu0
          %v1980 = vadd.f32 %v625, %v1979
          %v1981 = vpop.f32.mrb[0].mxu0
          %v1982 = vpop.f32.mrb[0].mxu0
          %v1983 = vpop.f32.mrb[0].mxu0
          %1984 = vdwg.mxu0
          %v1985 = vmax.f32 %v1980, 0.0
          %v1986 = vpack.c.bf16 %v1985, %v1985
          %v1995 = vunpack.c.l.b16 %v493
          %v1996 = vunpack.c.l.b16 %v494
          %v1997 = vunpack.c.l.b16 %v495
          %v1998 = vunpack.c.l.b16 %v496
          %v1999 = vunpack.c.l.b16 %v497
          %v2000 = vunpack.c.l.b16 %v498
          %v2001 = vunpack.c.l.b16 %v499
          %v2002 = vunpack.c.l.b16 %v500
          %v2003 = vpack.c.b16 %v1996, %v1995
          %v2004 = vpack.c.b16 %v1998, %v1997
          %v2005 = vpack.c.b16 %v2000, %v1999
          %v2006 = vpack.c.b16 %v2002, %v2001
          %vm2011 = vcmask 523264
          %v2013 = vsel %vm2011, %v1986, 0
          %2015 = vmatprep.subr.bf16.mxu0 0
          %2016 = vmatpush1.bf16.msra.mxu0 %v2003
          %2017 = vmatprep.subr.bf16.mxu0 0
          %2018 = vmatpush1.bf16.msra.mxu0 %v2004
          %2019 = vmatprep.subr.bf16.mxu0 0
          %2020 = vmatpush1.bf16.msra.mxu0 %v2005
          %2021 = vmatprep.subr.bf16.mxu0 0
          %2022 = vmatpush1.bf16.msra.mxu0 %v2006
          %2023 = vmatprep.subr.bf16.mxu0 0
          %2024 = vmatpush1.bf16.msra.mxu0 0
          %2025 = vmatprep.subr.bf16.mxu0 0
          %2026 = vmatpush1.bf16.msra.mxu0 0
          %2027 = vmatprep.subr.bf16.mxu0 0
          %2028 = vmatpush1.bf16.msra.mxu0 0
          %2029 = vmatprep.subr.bf16.mxu0 0
          %2030 = vmatpush1.bf16.msra.mxu0 0
          %2031 = vmatprep.subr.bf16.mxu0 0
          %2032 = vmatpush1.bf16.msra.mxu0 0
          %2033 = vmatprep.subr.bf16.mxu0 0
          %2034 = vmatpush1.bf16.msra.mxu0 0
          %2035 = vmatprep.subr.bf16.mxu0 0
          %2036 = vmatpush1.bf16.msra.mxu0 0
          %2037 = vmatprep.subr.bf16.mxu0 0
          %2038 = vmatpush1.bf16.msra.mxu0 0
          %2039 = vmatprep.subr.bf16.mxu0 0
          %2040 = vmatpush1.bf16.msra.mxu0 0
          %2041 = vmatprep.subr.bf16.mxu0 0
          %2042 = vmatpush1.bf16.msra.mxu0 0
          %2043 = vmatprep.subr.bf16.mxu0 0
          %2044 = vmatpush1.bf16.msra.mxu0 0
          %2045 = vmatprep.subr.bf16.mxu0 0
          %2046 = vmatpush1.bf16.msra.mxu0 0
          %2047 = vmatprep.mubr.bf16.mxu0 0
          %2048 = vmatmul.mubr.bf16.gmra.mrb[0].mxu0 %v2013
          %v2049 = vpop.f32.mrb[0].mxu0
          %v2050 = vadd.f32 %v632, %v2049
          %v2051 = vpop.f32.mrb[0].mxu0
          %v2052 = vpop.f32.mrb[0].mxu0
          %v2053 = vpop.f32.mrb[0].mxu0
          %2054 = vdwg.mxu0
          %v2055 = vadd.f32 %v2050, %v1913
        $region77: #{tpu_custom_call.1} parent=71 // loop_footer
          %s640 = sadd.s32 1, %s636
        $region78: #{tpu_custom_call.1} parent=71 // loop_footer_branch
          %635 = sbr.rel target = $region74
        $region79: #{tpu_custom_call.1} parent=71 // loop_exit
          _
        %vm2056 = vcmask 261120
        %2057 = vst.msk [vmem:[%s431] sm:$0xff] %vm2056, %v641
        %s2058 = sand.u32 %s313, 1
        %s2059 = scalar_lea.sflag [#allocation3], %s2058
        %s2060 = sand.u32 %s313, 1
        %s2061 = smul.addr %s2060, 8
        %s2062 = scalar_lea.vmem [#allocation2], %s2061
        // Predicated region
        $region80: #{tpu_custom_call.1} parent=71 // pred_check
          %p2063 = pneg %p323
        $region81: #{tpu_custom_call.1} parent=71 // pred_check_branch
          %2065 = sbr.rel (%p2063) target = $region83
        $region82: #{tpu_custom_call.1} parent=71 // pred_region
          %s2067 = ssub.s32 128, 128
          %2068 = vsyncadd %s2059, %s2067
          %s2069 = smul.addr %s27, 128
          %s2070 = scalar_lea.hbm %s13, %s2069
          %s2072 = sshll.u32 %s2062, 4
          %s2073 = int_to_ptr.vmem [resolvable:$true] %s2072
          %2075 = dma.vmem_to_hbm [thread:$0]  %s2073, 128, %s2070, %s2059
        $region83: #{tpu_custom_call.1} parent=71 // pred_fallthru
          _
      $region72: #{tpu_custom_call.1} parent=5 // pred_fallthru
        _
      %p2076 = scmp.le.s32.totalorder 2, %s22
      // Predicated region
      $region84: #{tpu_custom_call.1} parent=5 // pred_check
        %p2077 = pneg %p2076
      $region85: #{tpu_custom_call.1} parent=5 // pred_check_branch
        %2079 = sbr.rel (%p2077) target = $region87
      $region86: #{tpu_custom_call.1} parent=5 // pred_region
        %s2080 = ssub.s32 %s22, 2
        // Predicated region
        $region88: #{tpu_custom_call.1} parent=86 // pred_check
          %p2081 = pneg %p329
        $region89: #{tpu_custom_call.1} parent=86 // pred_check_branch
          %2083 = sbr.rel (%p2081) target = $region91
        $region90: #{tpu_custom_call.1} parent=86 // pred_region
          %s2084 = sand.u32 %s314, 1
          %s2085 = scalar_lea.sflag [#allocation3], %s2084
          %s2086 = sand.u32 %s314, 1
          %s2087 = smul.addr %s2086, 8
          %s2088 = scalar_lea.vmem [#allocation2], %s2087
          %2089 = dma.done %s2085, 128
        $region91: #{tpu_custom_call.1} parent=86 // pred_fallthru
          _
      $region87: #{tpu_custom_call.1} parent=5 // pred_fallthru
        _
    $region6: #{tpu_custom_call.1} parent=1 // loop_footer
      %s26 = sadd.s32 1, %s22
    $region7: #{tpu_custom_call.1} parent=1 // loop_footer_branch
      %21 = sbr.rel target = $region3
    $region8: #{tpu_custom_call.1} parent=1 // loop_exit
      _
    %2090 = vsyncpa [#allocation3], 1
    %s2091 = scalar_lea.sflag [#allocation3], 1
    %2092 = vsyncpa %s2091, 1

</llo_original>
